<compile_context>
chip_gen: v5e
topology: v5e:2x2
jax: 0.10.0
libtpu: 0.0.40
codegen_flags: <defaults>
</compile_context>

<pallas_src>
import functools

import numpy as np
import jax
import jax.numpy as jnp
from jax.experimental import pallas as pl
from jax.experimental.pallas import tpu as pltpu


def _spatial_attention_kernel(x_ref, w_ref, cm_ref, o_ref, *, H, W, KS):
    # x_ref:  (Nb, C, H*W)   VMEM, input slab
    # w_ref:  (2*KS*KS,)     SMEM, conv1 weight (channel 0 = avg, 1 = max)
    # cm_ref: (KS, H*W)      VMEM, per-dx column-validity masks (0/1 f32)
    # o_ref:  (Nb, C, H*W)   VMEM, output slab
    pad = KS // 2
    HW = H * W
    nb = x_ref.shape[0]

    x = x_ref[...].astype(jnp.float32)            # (Nb, C, HW)

    # Channel pooling (reduction over the sublane axis).
    avg = jnp.mean(x, axis=1)                     # (Nb, HW)
    mx = jnp.max(x, axis=1)                       # (Nb, HW)

    # Zero-pad the flattened maps with pad*W + pad zeros on each side so the
    # conv tap (dy, dx) becomes the static lane slice [dy*W + dx, +HW).
    plen = pad * W + pad
    zpad = jnp.zeros((nb, plen), jnp.float32)
    avg_p = jnp.concatenate([zpad, avg, zpad], axis=1)   # (Nb, HW + 2*plen)
    max_p = jnp.concatenate([zpad, mx, zpad], axis=1)

    cm = cm_ref[...]                              # (KS, HW)

    s = jnp.zeros((nb, HW), jnp.float32)
    for dx in range(KS):
        t = jnp.zeros((nb, HW), jnp.float32)
        for dy in range(KS):
            off = dy * W + dx
            wa = w_ref[dy * KS + dx]              # avg-path tap weight (scalar)
            wm = w_ref[KS * KS + dy * KS + dx]    # max-path tap weight (scalar)
            t = t + wa * avg_p[:, off:off + HW] + wm * max_p[:, off:off + HW]
        # Column mask zeroes taps whose source column wrapped to the next row.
        s = s + cm[dx:dx + 1, :] * t

    # out = sigmoid(conv) * x + x = (1 + sigmoid(conv)) * x
    gate = 1.0 + 1.0 / (1.0 + jnp.exp(-s))        # (Nb, HW)
    o_ref[...] = (x * gate[:, None, :]).astype(o_ref.dtype)


def _pick_batch_block(N, C, HW, itemsize, target_bytes=1 << 20):
    """Largest divisor of N whose (C*HW) slab is ~<= 1 MiB, keeping >= 2 grid
    steps when N >= 2 (so both TensorCores are used on v7x)."""
    per_batch = max(1, C * HW * itemsize)
    cap = max(1, target_bytes // per_batch)
    if N >= 2:
        cap = min(cap, max(1, N // 2))
    cap = int(min(cap, N))
    nb = 1
    for d in range(1, cap + 1):
        if N % d == 0:
            nb = d
    return nb


def spatial_attention(x, conv_w, *, kernel_size=7, block_batch=None):
    """x: (N, C, H, W); conv_w: Conv2d(2, 1, k) weight, shape (1,2,k,k) or (2,k,k)."""
    N, C, H, W = x.shape
    KS = int(kernel_size)
    assert KS in (3, 7), "kernel size must be 3 or 7"
    assert conv_w.size == 2 * KS * KS
    pad = KS // 2
    HW = H * W

    x2 = x.reshape(N, C, HW)
    w_flat = conv_w.reshape(-1).astype(jnp.float32)          # (2*KS*KS,) -> SMEM

    # Per-dx column-validity masks (static; valid iff 0 <= col + dx - pad < W).
    cols = np.arange(HW, dtype=np.int64) % W
    col_masks = np.stack(
        [((cols + dx - pad >= 0) & (cols + dx - pad < W)).astype(np.float32)
         for dx in range(KS)])                                # (KS, HW)
    col_masks = jnp.asarray(col_masks)

    if block_batch is None:
        block_batch = _pick_batch_block(N, C, HW, x.dtype.itemsize)
    nb = int(block_batch)
    assert N % nb == 0, "block_batch must divide N"

    kernel = functools.partial(_spatial_attention_kernel, H=H, W=W, KS=KS)

    out = pl.pallas_call(
        kernel,
        out_shape=jax.ShapeDtypeStruct((N, C, HW), x.dtype),
        grid_spec=pltpu.PrefetchScalarGridSpec(
            num_scalar_prefetch=0,
            grid=(N // nb,),
            in_specs=[
                pl.BlockSpec((nb, C, HW), lambda n: (n, 0, 0)),
                pl.BlockSpec(memory_space=pltpu.MemorySpace.SMEM),
                pl.BlockSpec((KS, HW), lambda n: (0, 0)),
            ],
            out_specs=pl.BlockSpec((nb, C, HW), lambda n: (n, 0, 0)),
        ),
        compiler_params=pltpu.CompilerParams(
            dimension_semantics=("parallel",)),
    )(x2, w_flat, col_masks)
    return out.reshape(N, C, H, W)


def _reference(x, conv_w):
    """Pure-JAX reference of the PyTorch SpatialAttention.forward."""
    KS = conv_w.shape[-1]
    avg = jnp.mean(x, axis=1, keepdims=True)                 # (N,1,H,W)
    mx = jnp.max(x, axis=1, keepdims=True)                   # (N,1,H,W)
    cat = jnp.concatenate([avg, mx], axis=1)                 # (N,2,H,W)
    w = conv_w.reshape(1, 2, KS, KS)                         # OIHW
    s = jax.lax.conv_general_dilated(
        cat, w, window_strides=(1, 1), padding="SAME",
        dimension_numbers=("NCHW", "OIHW", "NCHW"))          # (N,1,H,W)
    return jax.nn.sigmoid(s) * x + x


if __name__ == "__main__":
    N, C, H, W = 2, 8, 16, 16        # H*W = 256: lane-dense (multiple of 128)
    KS = 7

    key = jax.random.PRNGKey(0)
    kx, kw = jax.random.split(key)
    x = jax.random.normal(kx, (N, C, H, W), dtype=jnp.float32)
    # Conv2d(2, 1, 7, padding=3, bias=False) weight, OIHW = (1, 2, 7, 7).
    conv_w = 0.1 * jax.random.normal(kw, (1, 2, KS, KS), dtype=jnp.float32)

    out = spatial_attention(x, conv_w, kernel_size=KS)
    out = jax.block_until_ready(out)

    ref = _reference(x, conv_w)
    assert out.shape == x.shape
    err = float(jnp.max(jnp.abs(out - ref)))
    assert jnp.allclose(out, ref, atol=1e-4, rtol=1e-4), f"mismatch vs ref: {err}"

    print("KERNEL_OK")
</pallas_src>

<mosaic_0001>
module attributes {stable_mosaic.version = 11 : i64} {
  func.func @_spatial_attention_kernel(%arg0: i32, %arg1: memref<1x8x256xf32, #tpu.memory_space<vmem>>, %arg2: memref<98xf32, #tpu.memory_space<smem>>, %arg3: memref<7x256xf32, #tpu.memory_space<vmem>>, %arg4: memref<1x8x256xf32, #tpu.memory_space<vmem>>) attributes {dimension_semantics = [#tpu.dimension_semantics<parallel>], iteration_bounds = array<i64: 2>, scalar_prefetch = 0 : i64, scratch_operands = 0 : i64, tpu.core_type = #tpu.core_type<tc>, window_params = [{transform_indices = @transform_0, window_bounds = array<i64: 1, 8, 256>}, {transform_indices = @transform_1, window_bounds = array<i64: 98>}, {pipeline_mode = #tpu.pipeline_mode<synchronous>, transform_indices = @transform_2, window_bounds = array<i64: 7, 256>}, {transform_indices = @transform_3, window_bounds = array<i64: 1, 8, 256>}]} {
    %c0 = arith.constant 0 : index
    %c0_0 = arith.constant 0 : index
    %c0_1 = arith.constant 0 : index
    %0 = vector.load %arg1[%c0, %c0_0, %c0_1] : memref<1x8x256xf32, #tpu.memory_space<vmem>>, vector<1x8x256xf32>
    %cst = arith.constant dense<0.000000e+00> : vector<1x256xf32>
    %1 = vector.multi_reduction <add>, %0, %cst [1] : vector<1x8x256xf32> to vector<1x256xf32>
    %cst_2 = arith.constant 8.000000e+00 : f32
    %2 = vector.broadcast %cst_2 : f32 to vector<1x256xf32>
    %3 = arith.divf %1, %2 : vector<1x256xf32>
    %cst_3 = arith.constant dense<0xFF800000> : vector<1x256xf32>
    %4 = vector.multi_reduction <maximumf>, %0, %cst_3 [1] : vector<1x8x256xf32> to vector<1x256xf32>
    %cst_4 = arith.constant 0.000000e+00 : f32
    %5 = vector.broadcast %cst_4 : f32 to vector<1x51xf32>
    %6 = tpu.concatenate %5, %3, %5 in 1 : vector<1x51xf32>, vector<1x256xf32>, vector<1x51xf32> -> vector<1x358xf32>
    %7 = tpu.concatenate %5, %4, %5 in 1 : vector<1x51xf32>, vector<1x256xf32>, vector<1x51xf32> -> vector<1x358xf32>
    %c0_5 = arith.constant 0 : index
    %c0_6 = arith.constant 0 : index
    %8 = vector.load %arg3[%c0_5, %c0_6] : memref<7x256xf32, #tpu.memory_space<vmem>>, vector<7x256xf32>
    %cst_7 = arith.constant 0.000000e+00 : f32
    %9 = vector.broadcast %cst_7 : f32 to vector<1x256xf32>
    %cst_8 = arith.constant 0.000000e+00 : f32
    %10 = vector.broadcast %cst_8 : f32 to vector<1x256xf32>
    %c0_9 = arith.constant 0 : index
    %11 = memref.load %arg2[%c0_9] : memref<98xf32, #tpu.memory_space<smem>>
    %c49 = arith.constant 49 : index
    %12 = memref.load %arg2[%c49] : memref<98xf32, #tpu.memory_space<smem>>
    %13 = vector.extract_strided_slice %6 {offsets = [0, 0], sizes = [1, 256], strides = [1, 1]} : vector<1x358xf32> to vector<1x256xf32>
    %14 = vector.broadcast %11 : f32 to vector<1x256xf32>
    %15 = arith.mulf %14, %13 : vector<1x256xf32>
    %16 = arith.addf %10, %15 : vector<1x256xf32>
    %17 = vector.extract_strided_slice %7 {offsets = [0, 0], sizes = [1, 256], strides = [1, 1]} : vector<1x358xf32> to vector<1x256xf32>
    %18 = vector.broadcast %12 : f32 to vector<1x256xf32>
    %19 = arith.mulf %18, %17 : vector<1x256xf32>
    %20 = arith.addf %16, %19 : vector<1x256xf32>
    %c7 = arith.constant 7 : index
    %21 = memref.load %arg2[%c7] : memref<98xf32, #tpu.memory_space<smem>>
    %c56 = arith.constant 56 : index
    %22 = memref.load %arg2[%c56] : memref<98xf32, #tpu.memory_space<smem>>
    %23 = vector.extract_strided_slice %6 {offsets = [0, 16], sizes = [1, 256], strides = [1, 1]} : vector<1x358xf32> to vector<1x256xf32>
    %24 = vector.broadcast %21 : f32 to vector<1x256xf32>
    %25 = arith.mulf %24, %23 : vector<1x256xf32>
    %26 = arith.addf %20, %25 : vector<1x256xf32>
    %27 = vector.extract_strided_slice %7 {offsets = [0, 16], sizes = [1, 256], strides = [1, 1]} : vector<1x358xf32> to vector<1x256xf32>
    %28 = vector.broadcast %22 : f32 to vector<1x256xf32>
    %29 = arith.mulf %28, %27 : vector<1x256xf32>
    %30 = arith.addf %26, %29 : vector<1x256xf32>
    %c14 = arith.constant 14 : index
    %31 = memref.load %arg2[%c14] : memref<98xf32, #tpu.memory_space<smem>>
    %c63 = arith.constant 63 : index
    %32 = memref.load %arg2[%c63] : memref<98xf32, #tpu.memory_space<smem>>
    %33 = vector.extract_strided_slice %6 {offsets = [0, 32], sizes = [1, 256], strides = [1, 1]} : vector<1x358xf32> to vector<1x256xf32>
    %34 = vector.broadcast %31 : f32 to vector<1x256xf32>
    %35 = arith.mulf %34, %33 : vector<1x256xf32>
    %36 = arith.addf %30, %35 : vector<1x256xf32>
    %37 = vector.extract_strided_slice %7 {offsets = [0, 32], sizes = [1, 256], strides = [1, 1]} : vector<1x358xf32> to vector<1x256xf32>
    %38 = vector.broadcast %32 : f32 to vector<1x256xf32>
    %39 = arith.mulf %38, %37 : vector<1x256xf32>
    %40 = arith.addf %36, %39 : vector<1x256xf32>
    %c21 = arith.constant 21 : index
    %41 = memref.load %arg2[%c21] : memref<98xf32, #tpu.memory_space<smem>>
    %c70 = arith.constant 70 : index
    %42 = memref.load %arg2[%c70] : memref<98xf32, #tpu.memory_space<smem>>
    %43 = vector.extract_strided_slice %6 {offsets = [0, 48], sizes = [1, 256], strides = [1, 1]} : vector<1x358xf32> to vector<1x256xf32>
    %44 = vector.broadcast %41 : f32 to vector<1x256xf32>
    %45 = arith.mulf %44, %43 : vector<1x256xf32>
    %46 = arith.addf %40, %45 : vector<1x256xf32>
    %47 = vector.extract_strided_slice %7 {offsets = [0, 48], sizes = [1, 256], strides = [1, 1]} : vector<1x358xf32> to vector<1x256xf32>
    %48 = vector.broadcast %42 : f32 to vector<1x256xf32>
    %49 = arith.mulf %48, %47 : vector<1x256xf32>
    %50 = arith.addf %46, %49 : vector<1x256xf32>
    %c28 = arith.constant 28 : index
    %51 = memref.load %arg2[%c28] : memref<98xf32, #tpu.memory_space<smem>>
    %c77 = arith.constant 77 : index
    %52 = memref.load %arg2[%c77] : memref<98xf32, #tpu.memory_space<smem>>
    %53 = vector.extract_strided_slice %6 {offsets = [0, 64], sizes = [1, 256], strides = [1, 1]} : vector<1x358xf32> to vector<1x256xf32>
    %54 = vector.broadcast %51 : f32 to vector<1x256xf32>
    %55 = arith.mulf %54, %53 : vector<1x256xf32>
    %56 = arith.addf %50, %55 : vector<1x256xf32>
    %57 = vector.extract_strided_slice %7 {offsets = [0, 64], sizes = [1, 256], strides = [1, 1]} : vector<1x358xf32> to vector<1x256xf32>
    %58 = vector.broadcast %52 : f32 to vector<1x256xf32>
    %59 = arith.mulf %58, %57 : vector<1x256xf32>
    %60 = arith.addf %56, %59 : vector<1x256xf32>
    %c35 = arith.constant 35 : index
    %61 = memref.load %arg2[%c35] : memref<98xf32, #tpu.memory_space<smem>>
    %c84 = arith.constant 84 : index
    %62 = memref.load %arg2[%c84] : memref<98xf32, #tpu.memory_space<smem>>
    %63 = vector.extract_strided_slice %6 {offsets = [0, 80], sizes = [1, 256], strides = [1, 1]} : vector<1x358xf32> to vector<1x256xf32>
    %64 = vector.broadcast %61 : f32 to vector<1x256xf32>
    %65 = arith.mulf %64, %63 : vector<1x256xf32>
    %66 = arith.addf %60, %65 : vector<1x256xf32>
    %67 = vector.extract_strided_slice %7 {offsets = [0, 80], sizes = [1, 256], strides = [1, 1]} : vector<1x358xf32> to vector<1x256xf32>
    %68 = vector.broadcast %62 : f32 to vector<1x256xf32>
    %69 = arith.mulf %68, %67 : vector<1x256xf32>
    %70 = arith.addf %66, %69 : vector<1x256xf32>
    %c42 = arith.constant 42 : index
    %71 = memref.load %arg2[%c42] : memref<98xf32, #tpu.memory_space<smem>>
    %c91 = arith.constant 91 : index
    %72 = memref.load %arg2[%c91] : memref<98xf32, #tpu.memory_space<smem>>
    %73 = vector.extract_strided_slice %6 {offsets = [0, 96], sizes = [1, 256], strides = [1, 1]} : vector<1x358xf32> to vector<1x256xf32>
    %74 = vector.broadcast %71 : f32 to vector<1x256xf32>
    %75 = arith.mulf %74, %73 : vector<1x256xf32>
    %76 = arith.addf %70, %75 : vector<1x256xf32>
    %77 = vector.extract_strided_slice %7 {offsets = [0, 96], sizes = [1, 256], strides = [1, 1]} : vector<1x358xf32> to vector<1x256xf32>
    %78 = vector.broadcast %72 : f32 to vector<1x256xf32>
    %79 = arith.mulf %78, %77 : vector<1x256xf32>
    %80 = arith.addf %76, %79 : vector<1x256xf32>
    %81 = vector.extract_strided_slice %8 {offsets = [0, 0], sizes = [1, 256], strides = [1, 1]} : vector<7x256xf32> to vector<1x256xf32>
    %82 = arith.mulf %81, %80 : vector<1x256xf32>
    %83 = arith.addf %9, %82 : vector<1x256xf32>
    %cst_10 = arith.constant 0.000000e+00 : f32
    %84 = vector.broadcast %cst_10 : f32 to vector<1x256xf32>
    %c1 = arith.constant 1 : index
    %85 = memref.load %arg2[%c1] : memref<98xf32, #tpu.memory_space<smem>>
    %c50 = arith.constant 50 : index
    %86 = memref.load %arg2[%c50] : memref<98xf32, #tpu.memory_space<smem>>
    %87 = vector.extract_strided_slice %6 {offsets = [0, 1], sizes = [1, 256], strides = [1, 1]} : vector<1x358xf32> to vector<1x256xf32>
    %88 = vector.broadcast %85 : f32 to vector<1x256xf32>
    %89 = arith.mulf %88, %87 : vector<1x256xf32>
    %90 = arith.addf %84, %89 : vector<1x256xf32>
    %91 = vector.extract_strided_slice %7 {offsets = [0, 1], sizes = [1, 256], strides = [1, 1]} : vector<1x358xf32> to vector<1x256xf32>
    %92 = vector.broadcast %86 : f32 to vector<1x256xf32>
    %93 = arith.mulf %92, %91 : vector<1x256xf32>
    %94 = arith.addf %90, %93 : vector<1x256xf32>
    %c8 = arith.constant 8 : index
    %95 = memref.load %arg2[%c8] : memref<98xf32, #tpu.memory_space<smem>>
    %c57 = arith.constant 57 : index
    %96 = memref.load %arg2[%c57] : memref<98xf32, #tpu.memory_space<smem>>
    %97 = vector.extract_strided_slice %6 {offsets = [0, 17], sizes = [1, 256], strides = [1, 1]} : vector<1x358xf32> to vector<1x256xf32>
    %98 = vector.broadcast %95 : f32 to vector<1x256xf32>
    %99 = arith.mulf %98, %97 : vector<1x256xf32>
    %100 = arith.addf %94, %99 : vector<1x256xf32>
    %101 = vector.extract_strided_slice %7 {offsets = [0, 17], sizes = [1, 256], strides = [1, 1]} : vector<1x358xf32> to vector<1x256xf32>
    %102 = vector.broadcast %96 : f32 to vector<1x256xf32>
    %103 = arith.mulf %102, %101 : vector<1x256xf32>
    %104 = arith.addf %100, %103 : vector<1x256xf32>
    %c15 = arith.constant 15 : index
    %105 = memref.load %arg2[%c15] : memref<98xf32, #tpu.memory_space<smem>>
    %c64 = arith.constant 64 : index
    %106 = memref.load %arg2[%c64] : memref<98xf32, #tpu.memory_space<smem>>
    %107 = vector.extract_strided_slice %6 {offsets = [0, 33], sizes = [1, 256], strides = [1, 1]} : vector<1x358xf32> to vector<1x256xf32>
    %108 = vector.broadcast %105 : f32 to vector<1x256xf32>
    %109 = arith.mulf %108, %107 : vector<1x256xf32>
    %110 = arith.addf %104, %109 : vector<1x256xf32>
    %111 = vector.extract_strided_slice %7 {offsets = [0, 33], sizes = [1, 256], strides = [1, 1]} : vector<1x358xf32> to vector<1x256xf32>
    %112 = vector.broadcast %106 : f32 to vector<1x256xf32>
    %113 = arith.mulf %112, %111 : vector<1x256xf32>
    %114 = arith.addf %110, %113 : vector<1x256xf32>
    %c22 = arith.constant 22 : index
    %115 = memref.load %arg2[%c22] : memref<98xf32, #tpu.memory_space<smem>>
    %c71 = arith.constant 71 : index
    %116 = memref.load %arg2[%c71] : memref<98xf32, #tpu.memory_space<smem>>
    %117 = vector.extract_strided_slice %6 {offsets = [0, 49], sizes = [1, 256], strides = [1, 1]} : vector<1x358xf32> to vector<1x256xf32>
    %118 = vector.broadcast %115 : f32 to vector<1x256xf32>
    %119 = arith.mulf %118, %117 : vector<1x256xf32>
    %120 = arith.addf %114, %119 : vector<1x256xf32>
    %121 = vector.extract_strided_slice %7 {offsets = [0, 49], sizes = [1, 256], strides = [1, 1]} : vector<1x358xf32> to vector<1x256xf32>
    %122 = vector.broadcast %116 : f32 to vector<1x256xf32>
    %123 = arith.mulf %122, %121 : vector<1x256xf32>
    %124 = arith.addf %120, %123 : vector<1x256xf32>
    %c29 = arith.constant 29 : index
    %125 = memref.load %arg2[%c29] : memref<98xf32, #tpu.memory_space<smem>>
    %c78 = arith.constant 78 : index
    %126 = memref.load %arg2[%c78] : memref<98xf32, #tpu.memory_space<smem>>
    %127 = vector.extract_strided_slice %6 {offsets = [0, 65], sizes = [1, 256], strides = [1, 1]} : vector<1x358xf32> to vector<1x256xf32>
    %128 = vector.broadcast %125 : f32 to vector<1x256xf32>
    %129 = arith.mulf %128, %127 : vector<1x256xf32>
    %130 = arith.addf %124, %129 : vector<1x256xf32>
    %131 = vector.extract_strided_slice %7 {offsets = [0, 65], sizes = [1, 256], strides = [1, 1]} : vector<1x358xf32> to vector<1x256xf32>
    %132 = vector.broadcast %126 : f32 to vector<1x256xf32>
    %133 = arith.mulf %132, %131 : vector<1x256xf32>
    %134 = arith.addf %130, %133 : vector<1x256xf32>
    %c36 = arith.constant 36 : index
    %135 = memref.load %arg2[%c36] : memref<98xf32, #tpu.memory_space<smem>>
    %c85 = arith.constant 85 : index
    %136 = memref.load %arg2[%c85] : memref<98xf32, #tpu.memory_space<smem>>
    %137 = vector.extract_strided_slice %6 {offsets = [0, 81], sizes = [1, 256], strides = [1, 1]} : vector<1x358xf32> to vector<1x256xf32>
    %138 = vector.broadcast %135 : f32 to vector<1x256xf32>
    %139 = arith.mulf %138, %137 : vector<1x256xf32>
    %140 = arith.addf %134, %139 : vector<1x256xf32>
    %141 = vector.extract_strided_slice %7 {offsets = [0, 81], sizes = [1, 256], strides = [1, 1]} : vector<1x358xf32> to vector<1x256xf32>
    %142 = vector.broadcast %136 : f32 to vector<1x256xf32>
    %143 = arith.mulf %142, %141 : vector<1x256xf32>
    %144 = arith.addf %140, %143 : vector<1x256xf32>
    %c43 = arith.constant 43 : index
    %145 = memref.load %arg2[%c43] : memref<98xf32, #tpu.memory_space<smem>>
    %c92 = arith.constant 92 : index
    %146 = memref.load %arg2[%c92] : memref<98xf32, #tpu.memory_space<smem>>
    %147 = vector.extract_strided_slice %6 {offsets = [0, 97], sizes = [1, 256], strides = [1, 1]} : vector<1x358xf32> to vector<1x256xf32>
    %148 = vector.broadcast %145 : f32 to vector<1x256xf32>
    %149 = arith.mulf %148, %147 : vector<1x256xf32>
    %150 = arith.addf %144, %149 : vector<1x256xf32>
    %151 = vector.extract_strided_slice %7 {offsets = [0, 97], sizes = [1, 256], strides = [1, 1]} : vector<1x358xf32> to vector<1x256xf32>
    %152 = vector.broadcast %146 : f32 to vector<1x256xf32>
    %153 = arith.mulf %152, %151 : vector<1x256xf32>
    %154 = arith.addf %150, %153 : vector<1x256xf32>
    %155 = vector.extract_strided_slice %8 {offsets = [1, 0], sizes = [1, 256], strides = [1, 1]} : vector<7x256xf32> to vector<1x256xf32>
    %156 = arith.mulf %155, %154 : vector<1x256xf32>
    %157 = arith.addf %83, %156 : vector<1x256xf32>
    %cst_11 = arith.constant 0.000000e+00 : f32
    %158 = vector.broadcast %cst_11 : f32 to vector<1x256xf32>
    %c2 = arith.constant 2 : index
    %159 = memref.load %arg2[%c2] : memref<98xf32, #tpu.memory_space<smem>>
    %c51 = arith.constant 51 : index
    %160 = memref.load %arg2[%c51] : memref<98xf32, #tpu.memory_space<smem>>
    %161 = vector.extract_strided_slice %6 {offsets = [0, 2], sizes = [1, 256], strides = [1, 1]} : vector<1x358xf32> to vector<1x256xf32>
    %162 = vector.broadcast %159 : f32 to vector<1x256xf32>
    %163 = arith.mulf %162, %161 : vector<1x256xf32>
    %164 = arith.addf %158, %163 : vector<1x256xf32>
    %165 = vector.extract_strided_slice %7 {offsets = [0, 2], sizes = [1, 256], strides = [1, 1]} : vector<1x358xf32> to vector<1x256xf32>
    %166 = vector.broadcast %160 : f32 to vector<1x256xf32>
    %167 = arith.mulf %166, %165 : vector<1x256xf32>
    %168 = arith.addf %164, %167 : vector<1x256xf32>
    %c9 = arith.constant 9 : index
    %169 = memref.load %arg2[%c9] : memref<98xf32, #tpu.memory_space<smem>>
    %c58 = arith.constant 58 : index
    %170 = memref.load %arg2[%c58] : memref<98xf32, #tpu.memory_space<smem>>
    %171 = vector.extract_strided_slice %6 {offsets = [0, 18], sizes = [1, 256], strides = [1, 1]} : vector<1x358xf32> to vector<1x256xf32>
    %172 = vector.broadcast %169 : f32 to vector<1x256xf32>
    %173 = arith.mulf %172, %171 : vector<1x256xf32>
    %174 = arith.addf %168, %173 : vector<1x256xf32>
    %175 = vector.extract_strided_slice %7 {offsets = [0, 18], sizes = [1, 256], strides = [1, 1]} : vector<1x358xf32> to vector<1x256xf32>
    %176 = vector.broadcast %170 : f32 to vector<1x256xf32>
    %177 = arith.mulf %176, %175 : vector<1x256xf32>
    %178 = arith.addf %174, %177 : vector<1x256xf32>
    %c16 = arith.constant 16 : index
    %179 = memref.load %arg2[%c16] : memref<98xf32, #tpu.memory_space<smem>>
    %c65 = arith.constant 65 : index
    %180 = memref.load %arg2[%c65] : memref<98xf32, #tpu.memory_space<smem>>
    %181 = vector.extract_strided_slice %6 {offsets = [0, 34], sizes = [1, 256], strides = [1, 1]} : vector<1x358xf32> to vector<1x256xf32>
    %182 = vector.broadcast %179 : f32 to vector<1x256xf32>
    %183 = arith.mulf %182, %181 : vector<1x256xf32>
    %184 = arith.addf %178, %183 : vector<1x256xf32>
    %185 = vector.extract_strided_slice %7 {offsets = [0, 34], sizes = [1, 256], strides = [1, 1]} : vector<1x358xf32> to vector<1x256xf32>
    %186 = vector.broadcast %180 : f32 to vector<1x256xf32>
    %187 = arith.mulf %186, %185 : vector<1x256xf32>
    %188 = arith.addf %184, %187 : vector<1x256xf32>
    %c23 = arith.constant 23 : index
    %189 = memref.load %arg2[%c23] : memref<98xf32, #tpu.memory_space<smem>>
    %c72 = arith.constant 72 : index
    %190 = memref.load %arg2[%c72] : memref<98xf32, #tpu.memory_space<smem>>
    %191 = vector.extract_strided_slice %6 {offsets = [0, 50], sizes = [1, 256], strides = [1, 1]} : vector<1x358xf32> to vector<1x256xf32>
    %192 = vector.broadcast %189 : f32 to vector<1x256xf32>
    %193 = arith.mulf %192, %191 : vector<1x256xf32>
    %194 = arith.addf %188, %193 : vector<1x256xf32>
    %195 = vector.extract_strided_slice %7 {offsets = [0, 50], sizes = [1, 256], strides = [1, 1]} : vector<1x358xf32> to vector<1x256xf32>
    %196 = vector.broadcast %190 : f32 to vector<1x256xf32>
    %197 = arith.mulf %196, %195 : vector<1x256xf32>
    %198 = arith.addf %194, %197 : vector<1x256xf32>
    %c30 = arith.constant 30 : index
    %199 = memref.load %arg2[%c30] : memref<98xf32, #tpu.memory_space<smem>>
    %c79 = arith.constant 79 : index
    %200 = memref.load %arg2[%c79] : memref<98xf32, #tpu.memory_space<smem>>
    %201 = vector.extract_strided_slice %6 {offsets = [0, 66], sizes = [1, 256], strides = [1, 1]} : vector<1x358xf32> to vector<1x256xf32>
    %202 = vector.broadcast %199 : f32 to vector<1x256xf32>
    %203 = arith.mulf %202, %201 : vector<1x256xf32>
    %204 = arith.addf %198, %203 : vector<1x256xf32>
    %205 = vector.extract_strided_slice %7 {offsets = [0, 66], sizes = [1, 256], strides = [1, 1]} : vector<1x358xf32> to vector<1x256xf32>
    %206 = vector.broadcast %200 : f32 to vector<1x256xf32>
    %207 = arith.mulf %206, %205 : vector<1x256xf32>
    %208 = arith.addf %204, %207 : vector<1x256xf32>
    %c37 = arith.constant 37 : index
    %209 = memref.load %arg2[%c37] : memref<98xf32, #tpu.memory_space<smem>>
    %c86 = arith.constant 86 : index
    %210 = memref.load %arg2[%c86] : memref<98xf32, #tpu.memory_space<smem>>
    %211 = vector.extract_strided_slice %6 {offsets = [0, 82], sizes = [1, 256], strides = [1, 1]} : vector<1x358xf32> to vector<1x256xf32>
    %212 = vector.broadcast %209 : f32 to vector<1x256xf32>
    %213 = arith.mulf %212, %211 : vector<1x256xf32>
    %214 = arith.addf %208, %213 : vector<1x256xf32>
    %215 = vector.extract_strided_slice %7 {offsets = [0, 82], sizes = [1, 256], strides = [1, 1]} : vector<1x358xf32> to vector<1x256xf32>
    %216 = vector.broadcast %210 : f32 to vector<1x256xf32>
    %217 = arith.mulf %216, %215 : vector<1x256xf32>
    %218 = arith.addf %214, %217 : vector<1x256xf32>
    %c44 = arith.constant 44 : index
    %219 = memref.load %arg2[%c44] : memref<98xf32, #tpu.memory_space<smem>>
    %c93 = arith.constant 93 : index
    %220 = memref.load %arg2[%c93] : memref<98xf32, #tpu.memory_space<smem>>
    %221 = vector.extract_strided_slice %6 {offsets = [0, 98], sizes = [1, 256], strides = [1, 1]} : vector<1x358xf32> to vector<1x256xf32>
    %222 = vector.broadcast %219 : f32 to vector<1x256xf32>
    %223 = arith.mulf %222, %221 : vector<1x256xf32>
    %224 = arith.addf %218, %223 : vector<1x256xf32>
    %225 = vector.extract_strided_slice %7 {offsets = [0, 98], sizes = [1, 256], strides = [1, 1]} : vector<1x358xf32> to vector<1x256xf32>
    %226 = vector.broadcast %220 : f32 to vector<1x256xf32>
    %227 = arith.mulf %226, %225 : vector<1x256xf32>
    %228 = arith.addf %224, %227 : vector<1x256xf32>
    %229 = vector.extract_strided_slice %8 {offsets = [2, 0], sizes = [1, 256], strides = [1, 1]} : vector<7x256xf32> to vector<1x256xf32>
    %230 = arith.mulf %229, %228 : vector<1x256xf32>
    %231 = arith.addf %157, %230 : vector<1x256xf32>
    %cst_12 = arith.constant 0.000000e+00 : f32
    %232 = vector.broadcast %cst_12 : f32 to vector<1x256xf32>
    %c3 = arith.constant 3 : index
    %233 = memref.load %arg2[%c3] : memref<98xf32, #tpu.memory_space<smem>>
    %c52 = arith.constant 52 : index
    %234 = memref.load %arg2[%c52] : memref<98xf32, #tpu.memory_space<smem>>
    %235 = vector.extract_strided_slice %6 {offsets = [0, 3], sizes = [1, 256], strides = [1, 1]} : vector<1x358xf32> to vector<1x256xf32>
    %236 = vector.broadcast %233 : f32 to vector<1x256xf32>
    %237 = arith.mulf %236, %235 : vector<1x256xf32>
    %238 = arith.addf %232, %237 : vector<1x256xf32>
    %239 = vector.extract_strided_slice %7 {offsets = [0, 3], sizes = [1, 256], strides = [1, 1]} : vector<1x358xf32> to vector<1x256xf32>
    %240 = vector.broadcast %234 : f32 to vector<1x256xf32>
    %241 = arith.mulf %240, %239 : vector<1x256xf32>
    %242 = arith.addf %238, %241 : vector<1x256xf32>
    %c10 = arith.constant 10 : index
    %243 = memref.load %arg2[%c10] : memref<98xf32, #tpu.memory_space<smem>>
    %c59 = arith.constant 59 : index
    %244 = memref.load %arg2[%c59] : memref<98xf32, #tpu.memory_space<smem>>
    %245 = vector.extract_strided_slice %6 {offsets = [0, 19], sizes = [1, 256], strides = [1, 1]} : vector<1x358xf32> to vector<1x256xf32>
    %246 = vector.broadcast %243 : f32 to vector<1x256xf32>
    %247 = arith.mulf %246, %245 : vector<1x256xf32>
    %248 = arith.addf %242, %247 : vector<1x256xf32>
    %249 = vector.extract_strided_slice %7 {offsets = [0, 19], sizes = [1, 256], strides = [1, 1]} : vector<1x358xf32> to vector<1x256xf32>
    %250 = vector.broadcast %244 : f32 to vector<1x256xf32>
    %251 = arith.mulf %250, %249 : vector<1x256xf32>
    %252 = arith.addf %248, %251 : vector<1x256xf32>
    %c17 = arith.constant 17 : index
    %253 = memref.load %arg2[%c17] : memref<98xf32, #tpu.memory_space<smem>>
    %c66 = arith.constant 66 : index
    %254 = memref.load %arg2[%c66] : memref<98xf32, #tpu.memory_space<smem>>
    %255 = vector.extract_strided_slice %6 {offsets = [0, 35], sizes = [1, 256], strides = [1, 1]} : vector<1x358xf32> to vector<1x256xf32>
    %256 = vector.broadcast %253 : f32 to vector<1x256xf32>
    %257 = arith.mulf %256, %255 : vector<1x256xf32>
    %258 = arith.addf %252, %257 : vector<1x256xf32>
    %259 = vector.extract_strided_slice %7 {offsets = [0, 35], sizes = [1, 256], strides = [1, 1]} : vector<1x358xf32> to vector<1x256xf32>
    %260 = vector.broadcast %254 : f32 to vector<1x256xf32>
    %261 = arith.mulf %260, %259 : vector<1x256xf32>
    %262 = arith.addf %258, %261 : vector<1x256xf32>
    %c24 = arith.constant 24 : index
    %263 = memref.load %arg2[%c24] : memref<98xf32, #tpu.memory_space<smem>>
    %c73 = arith.constant 73 : index
    %264 = memref.load %arg2[%c73] : memref<98xf32, #tpu.memory_space<smem>>
    %265 = vector.extract_strided_slice %6 {offsets = [0, 51], sizes = [1, 256], strides = [1, 1]} : vector<1x358xf32> to vector<1x256xf32>
    %266 = vector.broadcast %263 : f32 to vector<1x256xf32>
    %267 = arith.mulf %266, %265 : vector<1x256xf32>
    %268 = arith.addf %262, %267 : vector<1x256xf32>
    %269 = vector.extract_strided_slice %7 {offsets = [0, 51], sizes = [1, 256], strides = [1, 1]} : vector<1x358xf32> to vector<1x256xf32>
    %270 = vector.broadcast %264 : f32 to vector<1x256xf32>
    %271 = arith.mulf %270, %269 : vector<1x256xf32>
    %272 = arith.addf %268, %271 : vector<1x256xf32>
    %c31 = arith.constant 31 : index
    %273 = memref.load %arg2[%c31] : memref<98xf32, #tpu.memory_space<smem>>
    %c80 = arith.constant 80 : index
    %274 = memref.load %arg2[%c80] : memref<98xf32, #tpu.memory_space<smem>>
    %275 = vector.extract_strided_slice %6 {offsets = [0, 67], sizes = [1, 256], strides = [1, 1]} : vector<1x358xf32> to vector<1x256xf32>
    %276 = vector.broadcast %273 : f32 to vector<1x256xf32>
    %277 = arith.mulf %276, %275 : vector<1x256xf32>
    %278 = arith.addf %272, %277 : vector<1x256xf32>
    %279 = vector.extract_strided_slice %7 {offsets = [0, 67], sizes = [1, 256], strides = [1, 1]} : vector<1x358xf32> to vector<1x256xf32>
    %280 = vector.broadcast %274 : f32 to vector<1x256xf32>
    %281 = arith.mulf %280, %279 : vector<1x256xf32>
    %282 = arith.addf %278, %281 : vector<1x256xf32>
    %c38 = arith.constant 38 : index
    %283 = memref.load %arg2[%c38] : memref<98xf32, #tpu.memory_space<smem>>
    %c87 = arith.constant 87 : index
    %284 = memref.load %arg2[%c87] : memref<98xf32, #tpu.memory_space<smem>>
    %285 = vector.extract_strided_slice %6 {offsets = [0, 83], sizes = [1, 256], strides = [1, 1]} : vector<1x358xf32> to vector<1x256xf32>
    %286 = vector.broadcast %283 : f32 to vector<1x256xf32>
    %287 = arith.mulf %286, %285 : vector<1x256xf32>
    %288 = arith.addf %282, %287 : vector<1x256xf32>
    %289 = vector.extract_strided_slice %7 {offsets = [0, 83], sizes = [1, 256], strides = [1, 1]} : vector<1x358xf32> to vector<1x256xf32>
    %290 = vector.broadcast %284 : f32 to vector<1x256xf32>
    %291 = arith.mulf %290, %289 : vector<1x256xf32>
    %292 = arith.addf %288, %291 : vector<1x256xf32>
    %c45 = arith.constant 45 : index
    %293 = memref.load %arg2[%c45] : memref<98xf32, #tpu.memory_space<smem>>
    %c94 = arith.constant 94 : index
    %294 = memref.load %arg2[%c94] : memref<98xf32, #tpu.memory_space<smem>>
    %295 = vector.extract_strided_slice %6 {offsets = [0, 99], sizes = [1, 256], strides = [1, 1]} : vector<1x358xf32> to vector<1x256xf32>
    %296 = vector.broadcast %293 : f32 to vector<1x256xf32>
    %297 = arith.mulf %296, %295 : vector<1x256xf32>
    %298 = arith.addf %292, %297 : vector<1x256xf32>
    %299 = vector.extract_strided_slice %7 {offsets = [0, 99], sizes = [1, 256], strides = [1, 1]} : vector<1x358xf32> to vector<1x256xf32>
    %300 = vector.broadcast %294 : f32 to vector<1x256xf32>
    %301 = arith.mulf %300, %299 : vector<1x256xf32>
    %302 = arith.addf %298, %301 : vector<1x256xf32>
    %303 = vector.extract_strided_slice %8 {offsets = [3, 0], sizes = [1, 256], strides = [1, 1]} : vector<7x256xf32> to vector<1x256xf32>
    %304 = arith.mulf %303, %302 : vector<1x256xf32>
    %305 = arith.addf %231, %304 : vector<1x256xf32>
    %cst_13 = arith.constant 0.000000e+00 : f32
    %306 = vector.broadcast %cst_13 : f32 to vector<1x256xf32>
    %c4 = arith.constant 4 : index
    %307 = memref.load %arg2[%c4] : memref<98xf32, #tpu.memory_space<smem>>
    %c53 = arith.constant 53 : index
    %308 = memref.load %arg2[%c53] : memref<98xf32, #tpu.memory_space<smem>>
    %309 = vector.extract_strided_slice %6 {offsets = [0, 4], sizes = [1, 256], strides = [1, 1]} : vector<1x358xf32> to vector<1x256xf32>
    %310 = vector.broadcast %307 : f32 to vector<1x256xf32>
    %311 = arith.mulf %310, %309 : vector<1x256xf32>
    %312 = arith.addf %306, %311 : vector<1x256xf32>
    %313 = vector.extract_strided_slice %7 {offsets = [0, 4], sizes = [1, 256], strides = [1, 1]} : vector<1x358xf32> to vector<1x256xf32>
    %314 = vector.broadcast %308 : f32 to vector<1x256xf32>
    %315 = arith.mulf %314, %313 : vector<1x256xf32>
    %316 = arith.addf %312, %315 : vector<1x256xf32>
    %c11 = arith.constant 11 : index
    %317 = memref.load %arg2[%c11] : memref<98xf32, #tpu.memory_space<smem>>
    %c60 = arith.constant 60 : index
    %318 = memref.load %arg2[%c60] : memref<98xf32, #tpu.memory_space<smem>>
    %319 = vector.extract_strided_slice %6 {offsets = [0, 20], sizes = [1, 256], strides = [1, 1]} : vector<1x358xf32> to vector<1x256xf32>
    %320 = vector.broadcast %317 : f32 to vector<1x256xf32>
    %321 = arith.mulf %320, %319 : vector<1x256xf32>
    %322 = arith.addf %316, %321 : vector<1x256xf32>
    %323 = vector.extract_strided_slice %7 {offsets = [0, 20], sizes = [1, 256], strides = [1, 1]} : vector<1x358xf32> to vector<1x256xf32>
    %324 = vector.broadcast %318 : f32 to vector<1x256xf32>
    %325 = arith.mulf %324, %323 : vector<1x256xf32>
    %326 = arith.addf %322, %325 : vector<1x256xf32>
    %c18 = arith.constant 18 : index
    %327 = memref.load %arg2[%c18] : memref<98xf32, #tpu.memory_space<smem>>
    %c67 = arith.constant 67 : index
    %328 = memref.load %arg2[%c67] : memref<98xf32, #tpu.memory_space<smem>>
    %329 = vector.extract_strided_slice %6 {offsets = [0, 36], sizes = [1, 256], strides = [1, 1]} : vector<1x358xf32> to vector<1x256xf32>
    %330 = vector.broadcast %327 : f32 to vector<1x256xf32>
    %331 = arith.mulf %330, %329 : vector<1x256xf32>
    %332 = arith.addf %326, %331 : vector<1x256xf32>
    %333 = vector.extract_strided_slice %7 {offsets = [0, 36], sizes = [1, 256], strides = [1, 1]} : vector<1x358xf32> to vector<1x256xf32>
    %334 = vector.broadcast %328 : f32 to vector<1x256xf32>
    %335 = arith.mulf %334, %333 : vector<1x256xf32>
    %336 = arith.addf %332, %335 : vector<1x256xf32>
    %c25 = arith.constant 25 : index
    %337 = memref.load %arg2[%c25] : memref<98xf32, #tpu.memory_space<smem>>
    %c74 = arith.constant 74 : index
    %338 = memref.load %arg2[%c74] : memref<98xf32, #tpu.memory_space<smem>>
    %339 = vector.extract_strided_slice %6 {offsets = [0, 52], sizes = [1, 256], strides = [1, 1]} : vector<1x358xf32> to vector<1x256xf32>
    %340 = vector.broadcast %337 : f32 to vector<1x256xf32>
    %341 = arith.mulf %340, %339 : vector<1x256xf32>
    %342 = arith.addf %336, %341 : vector<1x256xf32>
    %343 = vector.extract_strided_slice %7 {offsets = [0, 52], sizes = [1, 256], strides = [1, 1]} : vector<1x358xf32> to vector<1x256xf32>
    %344 = vector.broadcast %338 : f32 to vector<1x256xf32>
    %345 = arith.mulf %344, %343 : vector<1x256xf32>
    %346 = arith.addf %342, %345 : vector<1x256xf32>
    %c32 = arith.constant 32 : index
    %347 = memref.load %arg2[%c32] : memref<98xf32, #tpu.memory_space<smem>>
    %c81 = arith.constant 81 : index
    %348 = memref.load %arg2[%c81] : memref<98xf32, #tpu.memory_space<smem>>
    %349 = vector.extract_strided_slice %6 {offsets = [0, 68], sizes = [1, 256], strides = [1, 1]} : vector<1x358xf32> to vector<1x256xf32>
    %350 = vector.broadcast %347 : f32 to vector<1x256xf32>
    %351 = arith.mulf %350, %349 : vector<1x256xf32>
    %352 = arith.addf %346, %351 : vector<1x256xf32>
    %353 = vector.extract_strided_slice %7 {offsets = [0, 68], sizes = [1, 256], strides = [1, 1]} : vector<1x358xf32> to vector<1x256xf32>
    %354 = vector.broadcast %348 : f32 to vector<1x256xf32>
    %355 = arith.mulf %354, %353 : vector<1x256xf32>
    %356 = arith.addf %352, %355 : vector<1x256xf32>
    %c39 = arith.constant 39 : index
    %357 = memref.load %arg2[%c39] : memref<98xf32, #tpu.memory_space<smem>>
    %c88 = arith.constant 88 : index
    %358 = memref.load %arg2[%c88] : memref<98xf32, #tpu.memory_space<smem>>
    %359 = vector.extract_strided_slice %6 {offsets = [0, 84], sizes = [1, 256], strides = [1, 1]} : vector<1x358xf32> to vector<1x256xf32>
    %360 = vector.broadcast %357 : f32 to vector<1x256xf32>
    %361 = arith.mulf %360, %359 : vector<1x256xf32>
    %362 = arith.addf %356, %361 : vector<1x256xf32>
    %363 = vector.extract_strided_slice %7 {offsets = [0, 84], sizes = [1, 256], strides = [1, 1]} : vector<1x358xf32> to vector<1x256xf32>
    %364 = vector.broadcast %358 : f32 to vector<1x256xf32>
    %365 = arith.mulf %364, %363 : vector<1x256xf32>
    %366 = arith.addf %362, %365 : vector<1x256xf32>
    %c46 = arith.constant 46 : index
    %367 = memref.load %arg2[%c46] : memref<98xf32, #tpu.memory_space<smem>>
    %c95 = arith.constant 95 : index
    %368 = memref.load %arg2[%c95] : memref<98xf32, #tpu.memory_space<smem>>
    %369 = vector.extract_strided_slice %6 {offsets = [0, 100], sizes = [1, 256], strides = [1, 1]} : vector<1x358xf32> to vector<1x256xf32>
    %370 = vector.broadcast %367 : f32 to vector<1x256xf32>
    %371 = arith.mulf %370, %369 : vector<1x256xf32>
    %372 = arith.addf %366, %371 : vector<1x256xf32>
    %373 = vector.extract_strided_slice %7 {offsets = [0, 100], sizes = [1, 256], strides = [1, 1]} : vector<1x358xf32> to vector<1x256xf32>
    %374 = vector.broadcast %368 : f32 to vector<1x256xf32>
    %375 = arith.mulf %374, %373 : vector<1x256xf32>
    %376 = arith.addf %372, %375 : vector<1x256xf32>
    %377 = vector.extract_strided_slice %8 {offsets = [4, 0], sizes = [1, 256], strides = [1, 1]} : vector<7x256xf32> to vector<1x256xf32>
    %378 = arith.mulf %377, %376 : vector<1x256xf32>
    %379 = arith.addf %305, %378 : vector<1x256xf32>
    %cst_14 = arith.constant 0.000000e+00 : f32
    %380 = vector.broadcast %cst_14 : f32 to vector<1x256xf32>
    %c5 = arith.constant 5 : index
    %381 = memref.load %arg2[%c5] : memref<98xf32, #tpu.memory_space<smem>>
    %c54 = arith.constant 54 : index
    %382 = memref.load %arg2[%c54] : memref<98xf32, #tpu.memory_space<smem>>
    %383 = vector.extract_strided_slice %6 {offsets = [0, 5], sizes = [1, 256], strides = [1, 1]} : vector<1x358xf32> to vector<1x256xf32>
    %384 = vector.broadcast %381 : f32 to vector<1x256xf32>
    %385 = arith.mulf %384, %383 : vector<1x256xf32>
    %386 = arith.addf %380, %385 : vector<1x256xf32>
    %387 = vector.extract_strided_slice %7 {offsets = [0, 5], sizes = [1, 256], strides = [1, 1]} : vector<1x358xf32> to vector<1x256xf32>
    %388 = vector.broadcast %382 : f32 to vector<1x256xf32>
    %389 = arith.mulf %388, %387 : vector<1x256xf32>
    %390 = arith.addf %386, %389 : vector<1x256xf32>
    %c12 = arith.constant 12 : index
    %391 = memref.load %arg2[%c12] : memref<98xf32, #tpu.memory_space<smem>>
    %c61 = arith.constant 61 : index
    %392 = memref.load %arg2[%c61] : memref<98xf32, #tpu.memory_space<smem>>
    %393 = vector.extract_strided_slice %6 {offsets = [0, 21], sizes = [1, 256], strides = [1, 1]} : vector<1x358xf32> to vector<1x256xf32>
    %394 = vector.broadcast %391 : f32 to vector<1x256xf32>
    %395 = arith.mulf %394, %393 : vector<1x256xf32>
    %396 = arith.addf %390, %395 : vector<1x256xf32>
    %397 = vector.extract_strided_slice %7 {offsets = [0, 21], sizes = [1, 256], strides = [1, 1]} : vector<1x358xf32> to vector<1x256xf32>
    %398 = vector.broadcast %392 : f32 to vector<1x256xf32>
    %399 = arith.mulf %398, %397 : vector<1x256xf32>
    %400 = arith.addf %396, %399 : vector<1x256xf32>
    %c19 = arith.constant 19 : index
    %401 = memref.load %arg2[%c19] : memref<98xf32, #tpu.memory_space<smem>>
    %c68 = arith.constant 68 : index
    %402 = memref.load %arg2[%c68] : memref<98xf32, #tpu.memory_space<smem>>
    %403 = vector.extract_strided_slice %6 {offsets = [0, 37], sizes = [1, 256], strides = [1, 1]} : vector<1x358xf32> to vector<1x256xf32>
    %404 = vector.broadcast %401 : f32 to vector<1x256xf32>
    %405 = arith.mulf %404, %403 : vector<1x256xf32>
    %406 = arith.addf %400, %405 : vector<1x256xf32>
    %407 = vector.extract_strided_slice %7 {offsets = [0, 37], sizes = [1, 256], strides = [1, 1]} : vector<1x358xf32> to vector<1x256xf32>
    %408 = vector.broadcast %402 : f32 to vector<1x256xf32>
    %409 = arith.mulf %408, %407 : vector<1x256xf32>
    %410 = arith.addf %406, %409 : vector<1x256xf32>
    %c26 = arith.constant 26 : index
    %411 = memref.load %arg2[%c26] : memref<98xf32, #tpu.memory_space<smem>>
    %c75 = arith.constant 75 : index
    %412 = memref.load %arg2[%c75] : memref<98xf32, #tpu.memory_space<smem>>
    %413 = vector.extract_strided_slice %6 {offsets = [0, 53], sizes = [1, 256], strides = [1, 1]} : vector<1x358xf32> to vector<1x256xf32>
    %414 = vector.broadcast %411 : f32 to vector<1x256xf32>
    %415 = arith.mulf %414, %413 : vector<1x256xf32>
    %416 = arith.addf %410, %415 : vector<1x256xf32>
    %417 = vector.extract_strided_slice %7 {offsets = [0, 53], sizes = [1, 256], strides = [1, 1]} : vector<1x358xf32> to vector<1x256xf32>
    %418 = vector.broadcast %412 : f32 to vector<1x256xf32>
    %419 = arith.mulf %418, %417 : vector<1x256xf32>
    %420 = arith.addf %416, %419 : vector<1x256xf32>
    %c33 = arith.constant 33 : index
    %421 = memref.load %arg2[%c33] : memref<98xf32, #tpu.memory_space<smem>>
    %c82 = arith.constant 82 : index
    %422 = memref.load %arg2[%c82] : memref<98xf32, #tpu.memory_space<smem>>
    %423 = vector.extract_strided_slice %6 {offsets = [0, 69], sizes = [1, 256], strides = [1, 1]} : vector<1x358xf32> to vector<1x256xf32>
    %424 = vector.broadcast %421 : f32 to vector<1x256xf32>
    %425 = arith.mulf %424, %423 : vector<1x256xf32>
    %426 = arith.addf %420, %425 : vector<1x256xf32>
    %427 = vector.extract_strided_slice %7 {offsets = [0, 69], sizes = [1, 256], strides = [1, 1]} : vector<1x358xf32> to vector<1x256xf32>
    %428 = vector.broadcast %422 : f32 to vector<1x256xf32>
    %429 = arith.mulf %428, %427 : vector<1x256xf32>
    %430 = arith.addf %426, %429 : vector<1x256xf32>
    %c40 = arith.constant 40 : index
    %431 = memref.load %arg2[%c40] : memref<98xf32, #tpu.memory_space<smem>>
    %c89 = arith.constant 89 : index
    %432 = memref.load %arg2[%c89] : memref<98xf32, #tpu.memory_space<smem>>
    %433 = vector.extract_strided_slice %6 {offsets = [0, 85], sizes = [1, 256], strides = [1, 1]} : vector<1x358xf32> to vector<1x256xf32>
    %434 = vector.broadcast %431 : f32 to vector<1x256xf32>
    %435 = arith.mulf %434, %433 : vector<1x256xf32>
    %436 = arith.addf %430, %435 : vector<1x256xf32>
    %437 = vector.extract_strided_slice %7 {offsets = [0, 85], sizes = [1, 256], strides = [1, 1]} : vector<1x358xf32> to vector<1x256xf32>
    %438 = vector.broadcast %432 : f32 to vector<1x256xf32>
    %439 = arith.mulf %438, %437 : vector<1x256xf32>
    %440 = arith.addf %436, %439 : vector<1x256xf32>
    %c47 = arith.constant 47 : index
    %441 = memref.load %arg2[%c47] : memref<98xf32, #tpu.memory_space<smem>>
    %c96 = arith.constant 96 : index
    %442 = memref.load %arg2[%c96] : memref<98xf32, #tpu.memory_space<smem>>
    %443 = vector.extract_strided_slice %6 {offsets = [0, 101], sizes = [1, 256], strides = [1, 1]} : vector<1x358xf32> to vector<1x256xf32>
    %444 = vector.broadcast %441 : f32 to vector<1x256xf32>
    %445 = arith.mulf %444, %443 : vector<1x256xf32>
    %446 = arith.addf %440, %445 : vector<1x256xf32>
    %447 = vector.extract_strided_slice %7 {offsets = [0, 101], sizes = [1, 256], strides = [1, 1]} : vector<1x358xf32> to vector<1x256xf32>
    %448 = vector.broadcast %442 : f32 to vector<1x256xf32>
    %449 = arith.mulf %448, %447 : vector<1x256xf32>
    %450 = arith.addf %446, %449 : vector<1x256xf32>
    %451 = vector.extract_strided_slice %8 {offsets = [5, 0], sizes = [1, 256], strides = [1, 1]} : vector<7x256xf32> to vector<1x256xf32>
    %452 = arith.mulf %451, %450 : vector<1x256xf32>
    %453 = arith.addf %379, %452 : vector<1x256xf32>
    %cst_15 = arith.constant 0.000000e+00 : f32
    %454 = vector.broadcast %cst_15 : f32 to vector<1x256xf32>
    %c6 = arith.constant 6 : index
    %455 = memref.load %arg2[%c6] : memref<98xf32, #tpu.memory_space<smem>>
    %c55 = arith.constant 55 : index
    %456 = memref.load %arg2[%c55] : memref<98xf32, #tpu.memory_space<smem>>
    %457 = vector.extract_strided_slice %6 {offsets = [0, 6], sizes = [1, 256], strides = [1, 1]} : vector<1x358xf32> to vector<1x256xf32>
    %458 = vector.broadcast %455 : f32 to vector<1x256xf32>
    %459 = arith.mulf %458, %457 : vector<1x256xf32>
    %460 = arith.addf %454, %459 : vector<1x256xf32>
    %461 = vector.extract_strided_slice %7 {offsets = [0, 6], sizes = [1, 256], strides = [1, 1]} : vector<1x358xf32> to vector<1x256xf32>
    %462 = vector.broadcast %456 : f32 to vector<1x256xf32>
    %463 = arith.mulf %462, %461 : vector<1x256xf32>
    %464 = arith.addf %460, %463 : vector<1x256xf32>
    %c13 = arith.constant 13 : index
    %465 = memref.load %arg2[%c13] : memref<98xf32, #tpu.memory_space<smem>>
    %c62 = arith.constant 62 : index
    %466 = memref.load %arg2[%c62] : memref<98xf32, #tpu.memory_space<smem>>
    %467 = vector.extract_strided_slice %6 {offsets = [0, 22], sizes = [1, 256], strides = [1, 1]} : vector<1x358xf32> to vector<1x256xf32>
    %468 = vector.broadcast %465 : f32 to vector<1x256xf32>
    %469 = arith.mulf %468, %467 : vector<1x256xf32>
    %470 = arith.addf %464, %469 : vector<1x256xf32>
    %471 = vector.extract_strided_slice %7 {offsets = [0, 22], sizes = [1, 256], strides = [1, 1]} : vector<1x358xf32> to vector<1x256xf32>
    %472 = vector.broadcast %466 : f32 to vector<1x256xf32>
    %473 = arith.mulf %472, %471 : vector<1x256xf32>
    %474 = arith.addf %470, %473 : vector<1x256xf32>
    %c20 = arith.constant 20 : index
    %475 = memref.load %arg2[%c20] : memref<98xf32, #tpu.memory_space<smem>>
    %c69 = arith.constant 69 : index
    %476 = memref.load %arg2[%c69] : memref<98xf32, #tpu.memory_space<smem>>
    %477 = vector.extract_strided_slice %6 {offsets = [0, 38], sizes = [1, 256], strides = [1, 1]} : vector<1x358xf32> to vector<1x256xf32>
    %478 = vector.broadcast %475 : f32 to vector<1x256xf32>
    %479 = arith.mulf %478, %477 : vector<1x256xf32>
    %480 = arith.addf %474, %479 : vector<1x256xf32>
    %481 = vector.extract_strided_slice %7 {offsets = [0, 38], sizes = [1, 256], strides = [1, 1]} : vector<1x358xf32> to vector<1x256xf32>
    %482 = vector.broadcast %476 : f32 to vector<1x256xf32>
    %483 = arith.mulf %482, %481 : vector<1x256xf32>
    %484 = arith.addf %480, %483 : vector<1x256xf32>
    %c27 = arith.constant 27 : index
    %485 = memref.load %arg2[%c27] : memref<98xf32, #tpu.memory_space<smem>>
    %c76 = arith.constant 76 : index
    %486 = memref.load %arg2[%c76] : memref<98xf32, #tpu.memory_space<smem>>
    %487 = vector.extract_strided_slice %6 {offsets = [0, 54], sizes = [1, 256], strides = [1, 1]} : vector<1x358xf32> to vector<1x256xf32>
    %488 = vector.broadcast %485 : f32 to vector<1x256xf32>
    %489 = arith.mulf %488, %487 : vector<1x256xf32>
    %490 = arith.addf %484, %489 : vector<1x256xf32>
    %491 = vector.extract_strided_slice %7 {offsets = [0, 54], sizes = [1, 256], strides = [1, 1]} : vector<1x358xf32> to vector<1x256xf32>
    %492 = vector.broadcast %486 : f32 to vector<1x256xf32>
    %493 = arith.mulf %492, %491 : vector<1x256xf32>
    %494 = arith.addf %490, %493 : vector<1x256xf32>
    %c34 = arith.constant 34 : index
    %495 = memref.load %arg2[%c34] : memref<98xf32, #tpu.memory_space<smem>>
    %c83 = arith.constant 83 : index
    %496 = memref.load %arg2[%c83] : memref<98xf32, #tpu.memory_space<smem>>
    %497 = vector.extract_strided_slice %6 {offsets = [0, 70], sizes = [1, 256], strides = [1, 1]} : vector<1x358xf32> to vector<1x256xf32>
    %498 = vector.broadcast %495 : f32 to vector<1x256xf32>
    %499 = arith.mulf %498, %497 : vector<1x256xf32>
    %500 = arith.addf %494, %499 : vector<1x256xf32>
    %501 = vector.extract_strided_slice %7 {offsets = [0, 70], sizes = [1, 256], strides = [1, 1]} : vector<1x358xf32> to vector<1x256xf32>
    %502 = vector.broadcast %496 : f32 to vector<1x256xf32>
    %503 = arith.mulf %502, %501 : vector<1x256xf32>
    %504 = arith.addf %500, %503 : vector<1x256xf32>
    %c41 = arith.constant 41 : index
    %505 = memref.load %arg2[%c41] : memref<98xf32, #tpu.memory_space<smem>>
    %c90 = arith.constant 90 : index
    %506 = memref.load %arg2[%c90] : memref<98xf32, #tpu.memory_space<smem>>
    %507 = vector.extract_strided_slice %6 {offsets = [0, 86], sizes = [1, 256], strides = [1, 1]} : vector<1x358xf32> to vector<1x256xf32>
    %508 = vector.broadcast %505 : f32 to vector<1x256xf32>
    %509 = arith.mulf %508, %507 : vector<1x256xf32>
    %510 = arith.addf %504, %509 : vector<1x256xf32>
    %511 = vector.extract_strided_slice %7 {offsets = [0, 86], sizes = [1, 256], strides = [1, 1]} : vector<1x358xf32> to vector<1x256xf32>
    %512 = vector.broadcast %506 : f32 to vector<1x256xf32>
    %513 = arith.mulf %512, %511 : vector<1x256xf32>
    %514 = arith.addf %510, %513 : vector<1x256xf32>
    %c48 = arith.constant 48 : index
    %515 = memref.load %arg2[%c48] : memref<98xf32, #tpu.memory_space<smem>>
    %c97 = arith.constant 97 : index
    %516 = memref.load %arg2[%c97] : memref<98xf32, #tpu.memory_space<smem>>
    %517 = vector.extract_strided_slice %6 {offsets = [0, 102], sizes = [1, 256], strides = [1, 1]} : vector<1x358xf32> to vector<1x256xf32>
    %518 = vector.broadcast %515 : f32 to vector<1x256xf32>
    %519 = arith.mulf %518, %517 : vector<1x256xf32>
    %520 = arith.addf %514, %519 : vector<1x256xf32>
    %521 = vector.extract_strided_slice %7 {offsets = [0, 102], sizes = [1, 256], strides = [1, 1]} : vector<1x358xf32> to vector<1x256xf32>
    %522 = vector.broadcast %516 : f32 to vector<1x256xf32>
    %523 = arith.mulf %522, %521 : vector<1x256xf32>
    %524 = arith.addf %520, %523 : vector<1x256xf32>
    %525 = vector.extract_strided_slice %8 {offsets = [6, 0], sizes = [1, 256], strides = [1, 1]} : vector<7x256xf32> to vector<1x256xf32>
    %526 = arith.mulf %525, %524 : vector<1x256xf32>
    %527 = arith.addf %453, %526 : vector<1x256xf32>
    %cst_16 = arith.constant 0.000000e+00 : f32
    %528 = vector.broadcast %cst_16 : f32 to vector<1x256xf32>
    %529 = arith.subf %528, %527 : vector<1x256xf32>
    %530 = math.exp %529 : vector<1x256xf32>
    %cst_17 = arith.constant 1.000000e+00 : f32
    %531 = vector.broadcast %cst_17 : f32 to vector<1x256xf32>
    %532 = arith.addf %531, %530 : vector<1x256xf32>
    %cst_18 = arith.constant 1.000000e+00 : f32
    %533 = vector.broadcast %cst_18 : f32 to vector<1x256xf32>
    %534 = arith.divf %533, %532 : vector<1x256xf32>
    %cst_19 = arith.constant 1.000000e+00 : f32
    %535 = vector.broadcast %cst_19 : f32 to vector<1x256xf32>
    %536 = arith.addf %535, %534 : vector<1x256xf32>
    %537 = vector.shape_cast %536 : vector<1x256xf32> to vector<1x1x256xf32>
    %538 = vector.broadcast %537 : vector<1x1x256xf32> to vector<1x8x256xf32>
    %539 = arith.mulf %0, %538 : vector<1x8x256xf32>
    %c0_20 = arith.constant 0 : index
    %c0_21 = arith.constant 0 : index
    %c0_22 = arith.constant 0 : index
    %540 = vector.load %arg4[%c0_20, %c0_21, %c0_22] : memref<1x8x256xf32, #tpu.memory_space<vmem>>, vector<1x8x256xf32>
    tpu.vector_store %arg4[%c0_20, %c0_21, %c0_22], %539 {strides = array<i32>} : memref<1x8x256xf32, #tpu.memory_space<vmem>>, vector<1x8x256xf32>,
    return
  }
  func.func @transform_0(%arg0: i32) -> (i32, i32, i32) {
    %c0_i32 = arith.constant 0 : i32
    %c0_i32_0 = arith.constant 0 : i32
    %c0_i32_1 = arith.constant 0 : i32
    return %arg0, %c0_i32, %c0_i32_0 : i32, i32, i32
  }
  func.func @transform_1(%arg0: i32) -> i32 {
    %c0_i32 = arith.constant 0 : i32
    %c0_i32_0 = arith.constant 0 : i32
    return %c0_i32 : i32
  }
  func.func @transform_2(%arg0: i32) -> (i32, i32) {
    %c0_i32 = arith.constant 0 : i32
    %c0_i32_0 = arith.constant 0 : i32
    %c0_i32_1 = arith.constant 0 : i32
    return %c0_i32, %c0_i32_0 : i32, i32
  }
  func.func @transform_3(%arg0: i32) -> (i32, i32, i32) {
    %c0_i32 = arith.constant 0 : i32
    %c0_i32_0 = arith.constant 0 : i32
    %c0_i32_1 = arith.constant 0 : i32
    return %arg0, %c0_i32, %c0_i32_0 : i32, i32, i32
  }
}

</mosaic_0001>

<llo_original>
// kernel: tpu_custom_call.1
$region0: #{tpu_custom_call.1}
  #allocation0 [shape = 'u32[]', space=smem, size = 0x4, offset = 0x4, fixed_abs, tag = 'smem constant byte address 0x4 - core index']
  #allocation1 [shape = 'u32[72,128]{1,0:T(1,128)}', space=vmem, size = 0x9000, scoped, tag = 'internal scratch']
  %s0 = inlined_call_operand.hbm [shape: f32[2,8,256], index: 0, kind: input, shape index: {}]
  %s1 = inlined_call_operand.hbm [shape: f32[98], index: 1, kind: input, shape index: {}]
  %s2 = inlined_call_operand.hbm [shape: f32[7,256], index: 2, kind: input, shape index: {}]
  %s3 = inlined_call_operand.hbm [shape: f32[2,8,256], index: 3, kind: output, shape index: {}]
  %s4 = sld [smem:[#allocation0]]
  $region57: #{tpu_custom_call.1} parent=0
    _
  %s6 = ssub.s32 1, %s4
  %s7 = scalar_select 0, %s6, %s4
  $region1: #{tpu_custom_call.1} parent=0
    #allocation2 [shape = 'u8[16384]{0}', space=vmem, size = 0x4000, scoped, tag = 'input window, operand 0']
    #allocation3 [shape = 's32[2]{0}', space=sflag, size = 0x8, scoped, tag = 'scoped memory for tpu_custom_call.1']
    #allocation4 [shape = 's32[2]{0}', space=sflag, size = 0x8, scoped, tag = 'scoped memory for tpu_custom_call.1']
    #allocation5 [shape = 's32[2]{0}', space=sflag, size = 0x8, scoped, tag = 'scoped memory for tpu_custom_call.1']
    #allocation6 [shape = 'u8[512]{0}', space=smem, size = 0x200, scoped, tag = 'input window, operand 1, single buffered']
    #allocation7 [shape = 'u8[8192]{0}', space=vmem, size = 0x2000, scoped, tag = 'input window, operand 2, single buffered']
    #allocation8 [shape = 's32[1]{0}', space=sflag, size = 0x4, scoped, tag = 'scoped memory for tpu_custom_call.1']
    #allocation9 [shape = 'u8[16384]{0}', space=vmem, size = 0x4000, scoped, tag = 'output window, operand 0']
    %8 = vsyncpa [#allocation3], 0
    %s9 = scalar_lea.sflag [#allocation3], 1
    %10 = vsyncpa %s9, 0
    %11 = vsyncpa [#allocation5], 0
    %12 = vsyncpa [#allocation8], 0
    %13 = vsyncpa [#allocation4], 0
    %s14 = scalar_lea.sflag [#allocation4], 1
    %15 = vsyncpa %s14, 0
    loop: start=0, step=1, limit=4
    $region2: #{tpu_custom_call.1} parent=1 // loop_pre_header
      _
    $region3: #{tpu_custom_call.1} parent=1 // loop_header
      %s17 = sphi 0, %s21
      %p18 = scmp.ge.s32.totalorder %s17, 4
      %s27 = sphi 0, %s29
      %s30 = sphi 0, %s27
      %s31 = sphi 0, %s30
      %s47 = sphi 0, %s31
      %s51 = sphi 0, %s51
      %s53 = sphi 0, %s51
      %s54 = sphi 0, %s53
      %s68 = sphi 0, %s54
      %s72 = sphi 0, %s72
      %s74 = sphi 0, %s72
      %s75 = sphi 0, %s74
      %s89 = sphi 0, %s75
      %s95 = sphi 0, %s97
      %s98 = sphi 0, %s95
      %s99 = sphi 0, %s98
      %s115 = sphi 0, %s99
    $region4: #{tpu_custom_call.1} parent=1 // loop_header_branch
      %20 = sbr.rel (%p18) target = $region8
    $region5: #{tpu_custom_call.1} parent=1 // loop_body
      %s22 = ssub.s32 %s17, 1
      %s23 = ssub.s32 %s17, 2
      %s24 = sadd.s32 %s17, 1
      %s25 = ssub.s32 %s17, %s24
      %p26 = scmp.eq.s32.totalorder %s25, 0
      %s28 = sadd.s32 %s27, 1
      %s29 = scalar_select %p26, %s27, %s28
      %p32 = pneg %p26
      %p33 = scmp.eq.s32.totalorder %s17, 1
      %p34 = por %p32, %p33
      %p35 = scmp.ne.s32.totalorder %s27, %s30
      %p36 = scmp.eq.s32.totalorder %s17, 0
      %p37 = por %p35, %p36
      %p38 = scmp.ne.s32.totalorder %s27, %s30
      %p39 = scmp.eq.s32.totalorder %s22, 1
      %p40 = por %p38, %p39
      %p41 = scmp.ne.s32.totalorder %s30, %s31
      %p42 = scmp.eq.s32.totalorder %s22, 0
      %p43 = por %p41, %p42
      %p44 = scmp.ne.s32.totalorder %s30, %s31
      %p45 = scmp.eq.s32.totalorder %s23, 1
      %p46 = por %p44, %p45
      %p48 = scmp.ne.s32.totalorder %s31, %s47
      %p49 = scmp.eq.s32.totalorder %s23, 0
      %p50 = por %p48, %p49
      %s52 = sadd.s32 %s51, 1
      %p55 = scmp.eq.s32.totalorder %s17, 1
      %p56 = scmp.ne.s32.totalorder %s51, %s53
      %p57 = scmp.eq.s32.totalorder %s17, 0
      %p58 = por %p56, %p57
      %p59 = scmp.ne.s32.totalorder %s51, %s53
      %p60 = scmp.eq.s32.totalorder %s22, 1
      %p61 = por %p59, %p60
      %p62 = scmp.ne.s32.totalorder %s53, %s54
      %p63 = scmp.eq.s32.totalorder %s22, 0
      %p64 = por %p62, %p63
      %p65 = scmp.ne.s32.totalorder %s53, %s54
      %p66 = scmp.eq.s32.totalorder %s23, 1
      %p67 = por %p65, %p66
      %p69 = scmp.ne.s32.totalorder %s54, %s68
      %p70 = scmp.eq.s32.totalorder %s23, 0
      %p71 = por %p69, %p70
      %s73 = sadd.s32 %s72, 1
      %p76 = scmp.eq.s32.totalorder %s17, 1
      %p77 = scmp.ne.s32.totalorder %s72, %s74
      %p78 = scmp.eq.s32.totalorder %s17, 0
      %p79 = por %p77, %p78
      %p80 = scmp.ne.s32.totalorder %s72, %s74
      %p81 = scmp.eq.s32.totalorder %s22, 1
      %p82 = por %p80, %p81
      %p83 = scmp.ne.s32.totalorder %s74, %s75
      %p84 = scmp.eq.s32.totalorder %s22, 0
      %p85 = por %p83, %p84
      %p86 = scmp.ne.s32.totalorder %s74, %s75
      %p87 = scmp.eq.s32.totalorder %s23, 1
      %p88 = por %p86, %p87
      %p90 = scmp.ne.s32.totalorder %s75, %s89
      %p91 = scmp.eq.s32.totalorder %s23, 0
      %p92 = por %p90, %p91
      %s93 = ssub.s32 %s17, %s24
      %p94 = scmp.eq.s32.totalorder %s93, 0
      %s96 = sadd.s32 %s95, 1
      %s97 = scalar_select %p94, %s95, %s96
      %p100 = pneg %p94
      %p101 = scmp.eq.s32.totalorder %s17, 1
      %p102 = por %p100, %p101
      %p103 = scmp.ne.s32.totalorder %s95, %s98
      %p104 = scmp.eq.s32.totalorder %s17, 0
      %p105 = por %p103, %p104
      %p106 = scmp.ne.s32.totalorder %s95, %s98
      %p107 = scmp.eq.s32.totalorder %s22, 1
      %p108 = por %p106, %p107
      %p109 = scmp.ne.s32.totalorder %s98, %s99
      %p110 = scmp.eq.s32.totalorder %s22, 0
      %p111 = por %p109, %p110
      %p112 = scmp.ne.s32.totalorder %s98, %s99
      %p113 = scmp.eq.s32.totalorder %s23, 1
      %p114 = por %p112, %p113
      %p116 = scmp.ne.s32.totalorder %s99, %s115
      %p117 = scmp.eq.s32.totalorder %s23, 0
      %p118 = por %p116, %p117
      %p119 = scmp.le.s32.totalorder 1, %s17
      %p120 = scmp.lt.s32.totalorder %s17, 3
      %p121 = pnand %p119, %p120
      %p122 = pneg %p121
      // Predicated region
      $region9: #{tpu_custom_call.1} parent=5 // pred_check
        _
      $region10: #{tpu_custom_call.1} parent=5 // pred_check_branch
        %124 = sbr.rel (%p121) target = $region12
      $region11: #{tpu_custom_call.1} parent=5 // pred_region
        %s125 = ssub.s32 %s17, 1
        // Predicated region
        $region13: #{tpu_custom_call.1} parent=11 // pred_check
          %p126 = pneg %p64
        $region14: #{tpu_custom_call.1} parent=11 // pred_check_branch
          %128 = sbr.rel (%p126) target = $region16
        $region15: #{tpu_custom_call.1} parent=11 // pred_region
          %130 = vsyncadd [#allocation5], 0
          %s132 = sshll.u32 %s1, 4
          %s133 = int_to_ptr.hbm [resolvable:$true] %s132
          %135 = dma.hbm_to_smem %s133, 16, [#allocation6], [#allocation5]
        $region16: #{tpu_custom_call.1} parent=11 // pred_fallthru
          _
        // Predicated region
        $region17: #{tpu_custom_call.1} parent=11 // pred_check
          %p136 = pneg %p85
        $region18: #{tpu_custom_call.1} parent=11 // pred_check_branch
          %138 = sbr.rel (%p136) target = $region20
        $region19: #{tpu_custom_call.1} parent=11 // pred_region
          %140 = vsyncadd [#allocation8], 0
          %s142 = sshll.u32 %s2, 4
          %s143 = int_to_ptr.hbm [resolvable:$true] %s142
          %s144 = sshll.u32 [#allocation7], 4
          %s145 = int_to_ptr.vmem [resolvable:$true] %s144
          %147 = dma.hbm_to_vmem [thread:$0]  %s143, 256, %s145, [#allocation8]
        $region20: #{tpu_custom_call.1} parent=11 // pred_fallthru
          _
      $region12: #{tpu_custom_call.1} parent=5 // pred_fallthru
        _
      %p148 = scmp.lt.s32.totalorder %s17, 2
      // Predicated region
      $region21: #{tpu_custom_call.1} parent=5 // pred_check
        %p149 = pneg %p148
      $region22: #{tpu_custom_call.1} parent=5 // pred_check_branch
        %151 = sbr.rel (%p149) target = $region24
      $region23: #{tpu_custom_call.1} parent=5 // pred_region
        // Predicated region
        $region25: #{tpu_custom_call.1} parent=23 // pred_check
          %p152 = pneg %p37
        $region26: #{tpu_custom_call.1} parent=23 // pred_check_branch
          %154 = sbr.rel (%p152) target = $region28
        $region27: #{tpu_custom_call.1} parent=23 // pred_region
          %s155 = sand.u32 %s27, 1
          %s156 = scalar_lea.sflag [#allocation3], %s155
          %s157 = sand.u32 %s27, 1
          %s158 = smul.addr %s157, 16
          %s159 = scalar_lea.vmem [#allocation2], %s158
          %161 = vsyncadd %s156, 0
          %s162 = smul.addr %s17, 2
          %s163 = smul.addr %s162, 8
          %s164 = scalar_lea.hbm %s0, %s163
          %s166 = sshll.u32 %s164, 4
          %s167 = int_to_ptr.hbm [resolvable:$true] %s166
          %s168 = sshll.u32 %s159, 4
          %s169 = int_to_ptr.vmem [resolvable:$true] %s168
          %171 = dma.hbm_to_vmem [thread:$0]  %s167, 256, %s169, %s156
        $region28: #{tpu_custom_call.1} parent=23 // pred_fallthru
          _
      $region24: #{tpu_custom_call.1} parent=5 // pred_fallthru
        _
      %p172 = scmp.le.s32.totalorder 1, %s17
      %p173 = scmp.lt.s32.totalorder %s17, 3
      %p174 = pnand %p172, %p173
      %p175 = pneg %p174
      // Predicated region
      $region29: #{tpu_custom_call.1} parent=5 // pred_check
        _
      $region30: #{tpu_custom_call.1} parent=5 // pred_check_branch
        %177 = sbr.rel (%p174) target = $region32
      $region31: #{tpu_custom_call.1} parent=5 // pred_region
        %s178 = ssub.s32 %s17, 1
        %s179 = sand.u32 %s30, 1
        %s180 = scalar_lea.sflag [#allocation3], %s179
        %s181 = sand.u32 %s30, 1
        %s182 = smul.addr %s181, 16
        %s183 = scalar_lea.vmem [#allocation2], %s182
        // Predicated region
        $region33: #{tpu_custom_call.1} parent=31 // pred_check
          %p184 = pneg %p43
        $region34: #{tpu_custom_call.1} parent=31 // pred_check_branch
          %186 = sbr.rel (%p184) target = $region36
        $region35: #{tpu_custom_call.1} parent=31 // pred_region
          %188 = dma.done %s180, 256
        $region36: #{tpu_custom_call.1} parent=31 // pred_fallthru
          _
        // Predicated region
        $region37: #{tpu_custom_call.1} parent=31 // pred_check
          %p189 = pneg %p64
        $region38: #{tpu_custom_call.1} parent=31 // pred_check_branch
          %191 = sbr.rel (%p189) target = $region40
        $region39: #{tpu_custom_call.1} parent=31 // pred_region
          %193 = dma.done [#allocation5], 16
        $region40: #{tpu_custom_call.1} parent=31 // pred_fallthru
          _
        // Predicated region
        $region41: #{tpu_custom_call.1} parent=31 // pred_check
          %p194 = pneg %p85
        $region42: #{tpu_custom_call.1} parent=31 // pred_check_branch
          %196 = sbr.rel (%p194) target = $region44
        $region43: #{tpu_custom_call.1} parent=31 // pred_region
          %198 = dma.done [#allocation8], 256
        $region44: #{tpu_custom_call.1} parent=31 // pred_fallthru
          _
        %199 = sfence
        %s200 = sand.u32 %s30, 1
        %s201 = scalar_lea.sflag [#allocation3], %s200
        %s202 = sand.u32 %s30, 1
        %s203 = smul.addr %s202, 16
        %s204 = scalar_lea.vmem [#allocation2], %s203
        %p205 = pneg %p43
        %p206 = pneg %p40
        %p207 = pneg %p64
        %p208 = pneg %p61
        %p209 = pneg %p85
        %p210 = pneg %p82
        %p211 = pneg %p111
        %p212 = pneg %p108
        %s213 = sand.u32 %s98, 1
        %s214 = scalar_lea.sflag [#allocation4], %s213
        %s215 = sand.u32 %s98, 1
        %s216 = smul.addr %s215, 16
        %s217 = scalar_lea.vmem [#allocation9], %s216
        %v218 = vld [vmem:[%s183] sm:$0xff]
        %v219 = vld [vmem:[%s183 + $0x8] sm:$0xff]
        %v220 = vrot.slane %v218, 4
        %v221 = vadd.f32 %v218, %v220
        %v222 = vrot.slane %v221, 2
        %v223 = vadd.f32 %v221, %v222
        %v224 = vrot.slane %v223, 1
        %v225 = vadd.f32 %v223, %v224
        %v226 = vrot.slane %v219, 4
        %v227 = vadd.f32 %v219, %v226
        %v228 = vrot.slane %v227, 2
        %v229 = vadd.f32 %v227, %v228
        %v230 = vrot.slane %v229, 1
        %v231 = vadd.f32 %v229, %v230
        %v232 = vrcp.pop 8.0
        %v233 = vmul.f32 8.0, %v232
        %v234 = vsub.f32 1.0, %v233
        %v235 = vmul.f32 %v232, %v234
        %v236 = vadd.f32 %v232, %v235
        %vm237 = vweird.f32 %v232
        %v238 = vsel %vm237, %v232, %v236
        %v239 = vmul.f32 %v225, %v238
        %v240 = vmul.f32 %v231, %v238
        %v241 = vrot.slane %v218, 4
        %v242 = vmax.f32 %v218, %v241
        %v243 = vrot.slane %v242, 2
        %v244 = vmax.f32 %v242, %v243
        %v245 = vrot.slane %v244, 1
        %v246 = vmax.f32 %v244, %v245
        %v247 = vrot.slane %v219, 4
        %v248 = vmax.f32 %v219, %v247
        %v249 = vrot.slane %v248, 2
        %v250 = vmax.f32 %v248, %v249
        %v251 = vrot.slane %v250, 1
        %v252 = vmax.f32 %v250, %v251
        %255 = vrot.lane.b32.xlu0 %v239, 51
        %v256 = vpop.permute.xlu0 %255
        %257 = vrot.lane.b32.xlu0 %v240, 51
        %v258 = vpop.permute.xlu0 %257
        %vm259 = vcmask 416768
        %v260 = vsel %vm259, %v256, %v258
        %v264 = vsel %vm259, 0.0, %v256
        %v265 = vsel %vm259, %v258, 0.0
        %268 = vrot.lane.b32.xlu0 %v246, 51
        %v269 = vpop.permute.xlu0 %268
        %270 = vrot.lane.b32.xlu0 %v252, 51
        %v271 = vpop.permute.xlu0 %270
        %v272 = vsel %vm259, %v269, %v271
        %v276 = vsel %vm259, 0.0, %v269
        %v277 = vsel %vm259, %v271, 0.0
        %v278 = vld [vmem:[#allocation7] sm:$0x7f]
        %v279 = vld [vmem:[#allocation7 + $0x8] sm:$0x7f]
        %s280 = sld [smem:[#allocation6]]
        %s281 = sld [smem:[#allocation6 + $0x31]]
        %v282 = vstv %s280
        %v283 = vmul.f32 %v282, %v264
        %v284 = vmul.f32 %v282, %v260
        %v285 = vadd.f32 %v283, 0.0
        %v286 = vadd.f32 %v284, 0.0
        %v287 = vstv %s281
        %v288 = vmul.f32 %v287, %v276
        %v289 = vmul.f32 %v287, %v272
        %v290 = vadd.f32 %v285, %v288
        %v291 = vadd.f32 %v286, %v289
        %s292 = sld [smem:[#allocation6 + $0x7]]
        %s293 = sld [smem:[#allocation6 + $0x38]]
        %v294 = vstv %s292
        %v295 = vmul.f32 %v294, %v264
        %v296 = vmul.f32 %v294, %v260
        %v297 = vmul.f32 %v294, %v265
        %301 = vrot.lane.b32.xlu0 %v295, 112
        %v302 = vpop.permute.xlu0 %301
        %303 = vrot.lane.b32.xlu0 %v296, 112
        %v304 = vpop.permute.xlu0 %303
        %305 = vrot.lane.b32.xlu0 %v297, 112
        %v306 = vpop.permute.xlu0 %305
        %vm307 = vcmask 916480
        %v308 = vsel %vm307, %v302, %v304
        %v309 = vsel %vm307, %v304, %v306
        %v312 = vadd.f32 %v290, %v308
        %v313 = vadd.f32 %v291, %v309
        %v314 = vstv %s293
        %v315 = vmul.f32 %v314, %v276
        %v316 = vmul.f32 %v314, %v272
        %v317 = vmul.f32 %v314, %v277
        %321 = vrot.lane.b32.xlu0 %v315, 112
        %v322 = vpop.permute.xlu0 %321
        %323 = vrot.lane.b32.xlu0 %v316, 112
        %v324 = vpop.permute.xlu0 %323
        %325 = vrot.lane.b32.xlu0 %v317, 112
        %v326 = vpop.permute.xlu0 %325
        %v327 = vsel %vm307, %v322, %v324
        %v328 = vsel %vm307, %v324, %v326
        %v331 = vadd.f32 %v312, %v327
        %v332 = vadd.f32 %v313, %v328
        %s333 = sld [smem:[#allocation6 + $0xe]]
        %s334 = sld [smem:[#allocation6 + $0x3f]]
        %v335 = vstv %s333
        %v336 = vmul.f32 %v335, %v264
        %v337 = vmul.f32 %v335, %v260
        %v338 = vmul.f32 %v335, %v265
        %342 = vrot.lane.b32.xlu0 %v336, 96
        %v343 = vpop.permute.xlu0 %342
        %344 = vrot.lane.b32.xlu0 %v337, 96
        %v345 = vpop.permute.xlu0 %344
        %346 = vrot.lane.b32.xlu0 %v338, 96
        %v347 = vpop.permute.xlu0 %346
        %vm348 = vcmask 785408
        %v349 = vsel %vm348, %v343, %v345
        %v350 = vsel %vm348, %v345, %v347
        %v353 = vadd.f32 %v331, %v349
        %v354 = vadd.f32 %v332, %v350
        %v355 = vstv %s334
        %v356 = vmul.f32 %v355, %v276
        %v357 = vmul.f32 %v355, %v272
        %v358 = vmul.f32 %v355, %v277
        %362 = vrot.lane.b32.xlu0 %v356, 96
        %v363 = vpop.permute.xlu0 %362
        %364 = vrot.lane.b32.xlu0 %v357, 96
        %v365 = vpop.permute.xlu0 %364
        %366 = vrot.lane.b32.xlu0 %v358, 96
        %v367 = vpop.permute.xlu0 %366
        %v368 = vsel %vm348, %v363, %v365
        %v369 = vsel %vm348, %v365, %v367
        %v372 = vadd.f32 %v353, %v368
        %v373 = vadd.f32 %v354, %v369
        %s374 = sld [smem:[#allocation6 + $0x15]]
        %s375 = sld [smem:[#allocation6 + $0x46]]
        %v376 = vstv %s374
        %v377 = vmul.f32 %v376, %v264
        %v378 = vmul.f32 %v376, %v260
        %v379 = vmul.f32 %v376, %v265
        %383 = vrot.lane.b32.xlu0 %v377, 80
        %v384 = vpop.permute.xlu0 %383
        %385 = vrot.lane.b32.xlu0 %v378, 80
        %v386 = vpop.permute.xlu0 %385
        %387 = vrot.lane.b32.xlu0 %v379, 80
        %v388 = vpop.permute.xlu0 %387
        %vm389 = vcmask 654336
        %v390 = vsel %vm389, %v384, %v386
        %v391 = vsel %vm389, %v386, %v388
        %v394 = vadd.f32 %v372, %v390
        %v395 = vadd.f32 %v373, %v391
        %v396 = vstv %s375
        %v397 = vmul.f32 %v396, %v276
        %v398 = vmul.f32 %v396, %v272
        %v399 = vmul.f32 %v396, %v277
        %403 = vrot.lane.b32.xlu0 %v397, 80
        %v404 = vpop.permute.xlu0 %403
        %405 = vrot.lane.b32.xlu0 %v398, 80
        %v406 = vpop.permute.xlu0 %405
        %407 = vrot.lane.b32.xlu0 %v399, 80
        %v408 = vpop.permute.xlu0 %407
        %v409 = vsel %vm389, %v404, %v406
        %v410 = vsel %vm389, %v406, %v408
        %v413 = vadd.f32 %v394, %v409
        %v414 = vadd.f32 %v395, %v410
        %s415 = sld [smem:[#allocation6 + $0x1c]]
        %s416 = sld [smem:[#allocation6 + $0x4d]]
        %v417 = vstv %s415
        %v418 = vmul.f32 %v417, %v264
        %v419 = vmul.f32 %v417, %v260
        %v420 = vmul.f32 %v417, %v265
        %424 = vrot.lane.b32.xlu0 %v418, 64
        %v425 = vpop.permute.xlu0 %424
        %426 = vrot.lane.b32.xlu0 %v419, 64
        %v427 = vpop.permute.xlu0 %426
        %428 = vrot.lane.b32.xlu0 %v420, 64
        %v429 = vpop.permute.xlu0 %428
        %vm430 = vcmask 523264
        %v431 = vsel %vm430, %v425, %v427
        %v432 = vsel %vm430, %v427, %v429
        %v435 = vadd.f32 %v413, %v431
        %v436 = vadd.f32 %v414, %v432
        %v437 = vstv %s416
        %v438 = vmul.f32 %v437, %v276
        %v439 = vmul.f32 %v437, %v272
        %v440 = vmul.f32 %v437, %v277
        %444 = vrot.lane.b32.xlu0 %v438, 64
        %v445 = vpop.permute.xlu0 %444
        %446 = vrot.lane.b32.xlu0 %v439, 64
        %v447 = vpop.permute.xlu0 %446
        %448 = vrot.lane.b32.xlu0 %v440, 64
        %v449 = vpop.permute.xlu0 %448
        %v450 = vsel %vm430, %v445, %v447
        %v451 = vsel %vm430, %v447, %v449
        %v454 = vadd.f32 %v435, %v450
        %v455 = vadd.f32 %v436, %v451
        %s456 = sld [smem:[#allocation6 + $0x23]]
        %s457 = sld [smem:[#allocation6 + $0x54]]
        %v458 = vstv %s456
        %v459 = vmul.f32 %v458, %v264
        %v460 = vmul.f32 %v458, %v260
        %v461 = vmul.f32 %v458, %v265
        %465 = vrot.lane.b32.xlu0 %v459, 48
        %v466 = vpop.permute.xlu0 %465
        %467 = vrot.lane.b32.xlu0 %v460, 48
        %v468 = vpop.permute.xlu0 %467
        %469 = vrot.lane.b32.xlu0 %v461, 48
        %v470 = vpop.permute.xlu0 %469
        %vm471 = vcmask 392192
        %v472 = vsel %vm471, %v466, %v468
        %v473 = vsel %vm471, %v468, %v470
        %v476 = vadd.f32 %v454, %v472
        %v477 = vadd.f32 %v455, %v473
        %v478 = vstv %s457
        %v479 = vmul.f32 %v478, %v276
        %v480 = vmul.f32 %v478, %v272
        %v481 = vmul.f32 %v478, %v277
        %485 = vrot.lane.b32.xlu0 %v479, 48
        %v486 = vpop.permute.xlu0 %485
        %487 = vrot.lane.b32.xlu0 %v480, 48
        %v488 = vpop.permute.xlu0 %487
        %489 = vrot.lane.b32.xlu0 %v481, 48
        %v490 = vpop.permute.xlu0 %489
        %v491 = vsel %vm471, %v486, %v488
        %v492 = vsel %vm471, %v488, %v490
        %v495 = vadd.f32 %v476, %v491
        %v496 = vadd.f32 %v477, %v492
        %s497 = sld [smem:[#allocation6 + $0x2a]]
        %s498 = sld [smem:[#allocation6 + $0x5b]]
        %v499 = vstv %s497
        %v500 = vmul.f32 %v499, %v264
        %v501 = vmul.f32 %v499, %v260
        %v502 = vmul.f32 %v499, %v265
        %506 = vrot.lane.b32.xlu0 %v500, 32
        %v507 = vpop.permute.xlu0 %506
        %508 = vrot.lane.b32.xlu0 %v501, 32
        %v509 = vpop.permute.xlu0 %508
        %510 = vrot.lane.b32.xlu0 %v502, 32
        %v511 = vpop.permute.xlu0 %510
        %vm512 = vcmask 261120
        %v513 = vsel %vm512, %v507, %v509
        %v514 = vsel %vm512, %v509, %v511
        %v517 = vadd.f32 %v495, %v513
        %v518 = vadd.f32 %v496, %v514
        %v519 = vstv %s498
        %v520 = vmul.f32 %v519, %v276
        %v521 = vmul.f32 %v519, %v272
        %v522 = vmul.f32 %v519, %v277
        %526 = vrot.lane.b32.xlu0 %v520, 32
        %v527 = vpop.permute.xlu0 %526
        %528 = vrot.lane.b32.xlu0 %v521, 32
        %v529 = vpop.permute.xlu0 %528
        %530 = vrot.lane.b32.xlu0 %v522, 32
        %v531 = vpop.permute.xlu0 %530
        %v532 = vsel %vm512, %v527, %v529
        %v533 = vsel %vm512, %v529, %v531
        %v536 = vadd.f32 %v517, %v532
        %v537 = vadd.f32 %v518, %v533
        %v538 = vmul.f32 %v278, %v536
        %v539 = vmul.f32 %v279, %v537
        %v540 = vadd.f32 %v538, 0.0
        %v541 = vadd.f32 %v539, 0.0
        %s542 = sld [smem:[#allocation6 + $0x1]]
        %s543 = sld [smem:[#allocation6 + $0x32]]
        %v544 = vstv %s542
        %v545 = vmul.f32 %v544, %v264
        %v546 = vmul.f32 %v544, %v260
        %v547 = vmul.f32 %v544, %v265
        %v548 = vadd.f32 %v545, 0.0
        %v549 = vadd.f32 %v546, 0.0
        %v550 = vadd.f32 %v547, 0.0
        %v551 = vstv %s543
        %v552 = vmul.f32 %v551, %v276
        %v553 = vmul.f32 %v551, %v272
        %v554 = vmul.f32 %v551, %v277
        %v555 = vadd.f32 %v548, %v552
        %v556 = vadd.f32 %v549, %v553
        %v557 = vadd.f32 %v550, %v554
        %s558 = sld [smem:[#allocation6 + $0x8]]
        %s559 = sld [smem:[#allocation6 + $0x39]]
        %v560 = vstv %s558
        %v561 = vmul.f32 %v560, %v264
        %v562 = vmul.f32 %v560, %v260
        %v563 = vmul.f32 %v560, %v265
        %567 = vrot.lane.b32.xlu0 %v561, 112
        %v568 = vpop.permute.xlu0 %567
        %569 = vrot.lane.b32.xlu0 %v562, 112
        %v570 = vpop.permute.xlu0 %569
        %571 = vrot.lane.b32.xlu0 %v563, 112
        %v572 = vpop.permute.xlu0 %571
        %v573 = vsel %vm307, %v568, %v570
        %v574 = vsel %vm307, %v570, %v572
        %v578 = vadd.f32 %v555, %v573
        %v579 = vadd.f32 %v556, %v574
        %v580 = vadd.f32 %v557, %v572
        %v581 = vstv %s559
        %v582 = vmul.f32 %v581, %v276
        %v583 = vmul.f32 %v581, %v272
        %v584 = vmul.f32 %v581, %v277
        %588 = vrot.lane.b32.xlu0 %v582, 112
        %v589 = vpop.permute.xlu0 %588
        %590 = vrot.lane.b32.xlu0 %v583, 112
        %v591 = vpop.permute.xlu0 %590
        %592 = vrot.lane.b32.xlu0 %v584, 112
        %v593 = vpop.permute.xlu0 %592
        %v594 = vsel %vm307, %v589, %v591
        %v595 = vsel %vm307, %v591, %v593
        %v599 = vadd.f32 %v578, %v594
        %v600 = vadd.f32 %v579, %v595
        %v601 = vadd.f32 %v580, %v593
        %s602 = sld [smem:[#allocation6 + $0xf]]
        %s603 = sld [smem:[#allocation6 + $0x40]]
        %v604 = vstv %s602
        %v605 = vmul.f32 %v604, %v264
        %v606 = vmul.f32 %v604, %v260
        %v607 = vmul.f32 %v604, %v265
        %611 = vrot.lane.b32.xlu0 %v605, 96
        %v612 = vpop.permute.xlu0 %611
        %613 = vrot.lane.b32.xlu0 %v606, 96
        %v614 = vpop.permute.xlu0 %613
        %615 = vrot.lane.b32.xlu0 %v607, 96
        %v616 = vpop.permute.xlu0 %615
        %v617 = vsel %vm348, %v612, %v614
        %v618 = vsel %vm348, %v614, %v616
        %v622 = vadd.f32 %v599, %v617
        %v623 = vadd.f32 %v600, %v618
        %v624 = vadd.f32 %v601, %v616
        %v625 = vstv %s603
        %v626 = vmul.f32 %v625, %v276
        %v627 = vmul.f32 %v625, %v272
        %v628 = vmul.f32 %v625, %v277
        %632 = vrot.lane.b32.xlu0 %v626, 96
        %v633 = vpop.permute.xlu0 %632
        %634 = vrot.lane.b32.xlu0 %v627, 96
        %v635 = vpop.permute.xlu0 %634
        %636 = vrot.lane.b32.xlu0 %v628, 96
        %v637 = vpop.permute.xlu0 %636
        %v638 = vsel %vm348, %v633, %v635
        %v639 = vsel %vm348, %v635, %v637
        %v643 = vadd.f32 %v622, %v638
        %v644 = vadd.f32 %v623, %v639
        %v645 = vadd.f32 %v624, %v637
        %s646 = sld [smem:[#allocation6 + $0x16]]
        %s647 = sld [smem:[#allocation6 + $0x47]]
        %v648 = vstv %s646
        %v649 = vmul.f32 %v648, %v264
        %v650 = vmul.f32 %v648, %v260
        %v651 = vmul.f32 %v648, %v265
        %655 = vrot.lane.b32.xlu0 %v649, 80
        %v656 = vpop.permute.xlu0 %655
        %657 = vrot.lane.b32.xlu0 %v650, 80
        %v658 = vpop.permute.xlu0 %657
        %659 = vrot.lane.b32.xlu0 %v651, 80
        %v660 = vpop.permute.xlu0 %659
        %v661 = vsel %vm389, %v656, %v658
        %v662 = vsel %vm389, %v658, %v660
        %v666 = vadd.f32 %v643, %v661
        %v667 = vadd.f32 %v644, %v662
        %v668 = vadd.f32 %v645, %v660
        %v669 = vstv %s647
        %v670 = vmul.f32 %v669, %v276
        %v671 = vmul.f32 %v669, %v272
        %v672 = vmul.f32 %v669, %v277
        %676 = vrot.lane.b32.xlu0 %v670, 80
        %v677 = vpop.permute.xlu0 %676
        %678 = vrot.lane.b32.xlu0 %v671, 80
        %v679 = vpop.permute.xlu0 %678
        %680 = vrot.lane.b32.xlu0 %v672, 80
        %v681 = vpop.permute.xlu0 %680
        %v682 = vsel %vm389, %v677, %v679
        %v683 = vsel %vm389, %v679, %v681
        %v687 = vadd.f32 %v666, %v682
        %v688 = vadd.f32 %v667, %v683
        %v689 = vadd.f32 %v668, %v681
        %s690 = sld [smem:[#allocation6 + $0x1d]]
        %s691 = sld [smem:[#allocation6 + $0x4e]]
        %v692 = vstv %s690
        %v693 = vmul.f32 %v692, %v264
        %v694 = vmul.f32 %v692, %v260
        %v695 = vmul.f32 %v692, %v265
        %699 = vrot.lane.b32.xlu0 %v693, 64
        %v700 = vpop.permute.xlu0 %699
        %701 = vrot.lane.b32.xlu0 %v694, 64
        %v702 = vpop.permute.xlu0 %701
        %703 = vrot.lane.b32.xlu0 %v695, 64
        %v704 = vpop.permute.xlu0 %703
        %v705 = vsel %vm430, %v700, %v702
        %v706 = vsel %vm430, %v702, %v704
        %v710 = vadd.f32 %v687, %v705
        %v711 = vadd.f32 %v688, %v706
        %v712 = vadd.f32 %v689, %v704
        %v713 = vstv %s691
        %v714 = vmul.f32 %v713, %v276
        %v715 = vmul.f32 %v713, %v272
        %v716 = vmul.f32 %v713, %v277
        %720 = vrot.lane.b32.xlu0 %v714, 64
        %v721 = vpop.permute.xlu0 %720
        %722 = vrot.lane.b32.xlu0 %v715, 64
        %v723 = vpop.permute.xlu0 %722
        %724 = vrot.lane.b32.xlu0 %v716, 64
        %v725 = vpop.permute.xlu0 %724
        %v726 = vsel %vm430, %v721, %v723
        %v727 = vsel %vm430, %v723, %v725
        %v731 = vadd.f32 %v710, %v726
        %v732 = vadd.f32 %v711, %v727
        %v733 = vadd.f32 %v712, %v725
        %s734 = sld [smem:[#allocation6 + $0x24]]
        %s735 = sld [smem:[#allocation6 + $0x55]]
        %v736 = vstv %s734
        %v737 = vmul.f32 %v736, %v264
        %v738 = vmul.f32 %v736, %v260
        %v739 = vmul.f32 %v736, %v265
        %743 = vrot.lane.b32.xlu0 %v737, 48
        %v744 = vpop.permute.xlu0 %743
        %745 = vrot.lane.b32.xlu0 %v738, 48
        %v746 = vpop.permute.xlu0 %745
        %747 = vrot.lane.b32.xlu0 %v739, 48
        %v748 = vpop.permute.xlu0 %747
        %v749 = vsel %vm471, %v744, %v746
        %v750 = vsel %vm471, %v746, %v748
        %v754 = vadd.f32 %v731, %v749
        %v755 = vadd.f32 %v732, %v750
        %v756 = vadd.f32 %v733, %v748
        %v757 = vstv %s735
        %v758 = vmul.f32 %v757, %v276
        %v759 = vmul.f32 %v757, %v272
        %v760 = vmul.f32 %v757, %v277
        %764 = vrot.lane.b32.xlu0 %v758, 48
        %v765 = vpop.permute.xlu0 %764
        %766 = vrot.lane.b32.xlu0 %v759, 48
        %v767 = vpop.permute.xlu0 %766
        %768 = vrot.lane.b32.xlu0 %v760, 48
        %v769 = vpop.permute.xlu0 %768
        %v770 = vsel %vm471, %v765, %v767
        %v771 = vsel %vm471, %v767, %v769
        %v775 = vadd.f32 %v754, %v770
        %v776 = vadd.f32 %v755, %v771
        %v777 = vadd.f32 %v756, %v769
        %s778 = sld [smem:[#allocation6 + $0x2b]]
        %s779 = sld [smem:[#allocation6 + $0x5c]]
        %v780 = vstv %s778
        %v781 = vmul.f32 %v780, %v264
        %v782 = vmul.f32 %v780, %v260
        %v783 = vmul.f32 %v780, %v265
        %787 = vrot.lane.b32.xlu0 %v781, 32
        %v788 = vpop.permute.xlu0 %787
        %789 = vrot.lane.b32.xlu0 %v782, 32
        %v790 = vpop.permute.xlu0 %789
        %791 = vrot.lane.b32.xlu0 %v783, 32
        %v792 = vpop.permute.xlu0 %791
        %v793 = vsel %vm512, %v788, %v790
        %v794 = vsel %vm512, %v790, %v792
        %v798 = vadd.f32 %v775, %v793
        %v799 = vadd.f32 %v776, %v794
        %v800 = vadd.f32 %v777, %v792
        %v801 = vstv %s779
        %v802 = vmul.f32 %v801, %v276
        %v803 = vmul.f32 %v801, %v272
        %v804 = vmul.f32 %v801, %v277
        %808 = vrot.lane.b32.xlu0 %v802, 32
        %v809 = vpop.permute.xlu0 %808
        %810 = vrot.lane.b32.xlu0 %v803, 32
        %v811 = vpop.permute.xlu0 %810
        %812 = vrot.lane.b32.xlu0 %v804, 32
        %v813 = vpop.permute.xlu0 %812
        %v814 = vsel %vm512, %v809, %v811
        %v815 = vsel %vm512, %v811, %v813
        %v819 = vadd.f32 %v798, %v814
        %v820 = vadd.f32 %v799, %v815
        %v821 = vadd.f32 %v800, %v813
        %v825 = vrot.slane %v819, 7
        %v826 = vrot.slane %v820, 7
        %v827 = vrot.slane %v821, 7
        %828 = vrot.lane.b32.xlu0 %v825, 127
        %v829 = vpop.permute.xlu0 %828
        %830 = vrot.lane.b32.xlu0 %v826, 127
        %v831 = vpop.permute.xlu0 %830
        %832 = vrot.lane.b32.xlu0 %v827, 127
        %v833 = vpop.permute.xlu0 %832
        %vm834 = vcmask 1039360
        %v835 = vsel %vm834, %v829, %v831
        %v836 = vsel %vm834, %v831, %v833
        %v839 = vmul.f32 %v278, %v835
        %v840 = vmul.f32 %v279, %v836
        %v843 = vrot.slane %v839, 1
        %v844 = vrot.slane %v840, 1
        %v847 = vadd.f32 %v540, %v843
        %v848 = vadd.f32 %v541, %v844
        %s849 = sld [smem:[#allocation6 + $0x2]]
        %s850 = sld [smem:[#allocation6 + $0x33]]
        %v851 = vstv %s849
        %v852 = vmul.f32 %v851, %v264
        %v853 = vmul.f32 %v851, %v260
        %v854 = vmul.f32 %v851, %v265
        %v855 = vadd.f32 %v852, 0.0
        %v856 = vadd.f32 %v853, 0.0
        %v857 = vadd.f32 %v854, 0.0
        %v858 = vstv %s850
        %v859 = vmul.f32 %v858, %v276
        %v860 = vmul.f32 %v858, %v272
        %v861 = vmul.f32 %v858, %v277
        %v862 = vadd.f32 %v855, %v859
        %v863 = vadd.f32 %v856, %v860
        %v864 = vadd.f32 %v857, %v861
        %s865 = sld [smem:[#allocation6 + $0x9]]
        %s866 = sld [smem:[#allocation6 + $0x3a]]
        %v867 = vstv %s865
        %v868 = vmul.f32 %v867, %v264
        %v869 = vmul.f32 %v867, %v260
        %v870 = vmul.f32 %v867, %v265
        %874 = vrot.lane.b32.xlu0 %v868, 112
        %v875 = vpop.permute.xlu0 %874
        %876 = vrot.lane.b32.xlu0 %v869, 112
        %v877 = vpop.permute.xlu0 %876
        %878 = vrot.lane.b32.xlu0 %v870, 112
        %v879 = vpop.permute.xlu0 %878
        %v880 = vsel %vm307, %v875, %v877
        %v881 = vsel %vm307, %v877, %v879
        %v885 = vadd.f32 %v862, %v880
        %v886 = vadd.f32 %v863, %v881
        %v887 = vadd.f32 %v864, %v879
        %v888 = vstv %s866
        %v889 = vmul.f32 %v888, %v276
        %v890 = vmul.f32 %v888, %v272
        %v891 = vmul.f32 %v888, %v277
        %895 = vrot.lane.b32.xlu0 %v889, 112
        %v896 = vpop.permute.xlu0 %895
        %897 = vrot.lane.b32.xlu0 %v890, 112
        %v898 = vpop.permute.xlu0 %897
        %899 = vrot.lane.b32.xlu0 %v891, 112
        %v900 = vpop.permute.xlu0 %899
        %v901 = vsel %vm307, %v896, %v898
        %v902 = vsel %vm307, %v898, %v900
        %v906 = vadd.f32 %v885, %v901
        %v907 = vadd.f32 %v886, %v902
        %v908 = vadd.f32 %v887, %v900
        %s909 = sld [smem:[#allocation6 + $0x10]]
        %s910 = sld [smem:[#allocation6 + $0x41]]
        %v911 = vstv %s909
        %v912 = vmul.f32 %v911, %v264
        %v913 = vmul.f32 %v911, %v260
        %v914 = vmul.f32 %v911, %v265
        %918 = vrot.lane.b32.xlu0 %v912, 96
        %v919 = vpop.permute.xlu0 %918
        %920 = vrot.lane.b32.xlu0 %v913, 96
        %v921 = vpop.permute.xlu0 %920
        %922 = vrot.lane.b32.xlu0 %v914, 96
        %v923 = vpop.permute.xlu0 %922
        %v924 = vsel %vm348, %v919, %v921
        %v925 = vsel %vm348, %v921, %v923
        %v929 = vadd.f32 %v906, %v924
        %v930 = vadd.f32 %v907, %v925
        %v931 = vadd.f32 %v908, %v923
        %v932 = vstv %s910
        %v933 = vmul.f32 %v932, %v276
        %v934 = vmul.f32 %v932, %v272
        %v935 = vmul.f32 %v932, %v277
        %939 = vrot.lane.b32.xlu0 %v933, 96
        %v940 = vpop.permute.xlu0 %939
        %941 = vrot.lane.b32.xlu0 %v934, 96
        %v942 = vpop.permute.xlu0 %941
        %943 = vrot.lane.b32.xlu0 %v935, 96
        %v944 = vpop.permute.xlu0 %943
        %v945 = vsel %vm348, %v940, %v942
        %v946 = vsel %vm348, %v942, %v944
        %v950 = vadd.f32 %v929, %v945
        %v951 = vadd.f32 %v930, %v946
        %v952 = vadd.f32 %v931, %v944
        %s953 = sld [smem:[#allocation6 + $0x17]]
        %s954 = sld [smem:[#allocation6 + $0x48]]
        %v955 = vstv %s953
        %v956 = vmul.f32 %v955, %v264
        %v957 = vmul.f32 %v955, %v260
        %v958 = vmul.f32 %v955, %v265
        %962 = vrot.lane.b32.xlu0 %v956, 80
        %v963 = vpop.permute.xlu0 %962
        %964 = vrot.lane.b32.xlu0 %v957, 80
        %v965 = vpop.permute.xlu0 %964
        %966 = vrot.lane.b32.xlu0 %v958, 80
        %v967 = vpop.permute.xlu0 %966
        %v968 = vsel %vm389, %v963, %v965
        %v969 = vsel %vm389, %v965, %v967
        %v973 = vadd.f32 %v950, %v968
        %v974 = vadd.f32 %v951, %v969
        %v975 = vadd.f32 %v952, %v967
        %v976 = vstv %s954
        %v977 = vmul.f32 %v976, %v276
        %v978 = vmul.f32 %v976, %v272
        %v979 = vmul.f32 %v976, %v277
        %983 = vrot.lane.b32.xlu0 %v977, 80
        %v984 = vpop.permute.xlu0 %983
        %985 = vrot.lane.b32.xlu0 %v978, 80
        %v986 = vpop.permute.xlu0 %985
        %987 = vrot.lane.b32.xlu0 %v979, 80
        %v988 = vpop.permute.xlu0 %987
        %v989 = vsel %vm389, %v984, %v986
        %v990 = vsel %vm389, %v986, %v988
        %v994 = vadd.f32 %v973, %v989
        %v995 = vadd.f32 %v974, %v990
        %v996 = vadd.f32 %v975, %v988
        %s997 = sld [smem:[#allocation6 + $0x1e]]
        %s998 = sld [smem:[#allocation6 + $0x4f]]
        %v999 = vstv %s997
        %v1000 = vmul.f32 %v999, %v264
        %v1001 = vmul.f32 %v999, %v260
        %v1002 = vmul.f32 %v999, %v265
        %1006 = vrot.lane.b32.xlu0 %v1000, 64
        %v1007 = vpop.permute.xlu0 %1006
        %1008 = vrot.lane.b32.xlu0 %v1001, 64
        %v1009 = vpop.permute.xlu0 %1008
        %1010 = vrot.lane.b32.xlu0 %v1002, 64
        %v1011 = vpop.permute.xlu0 %1010
        %v1012 = vsel %vm430, %v1007, %v1009
        %v1013 = vsel %vm430, %v1009, %v1011
        %v1017 = vadd.f32 %v994, %v1012
        %v1018 = vadd.f32 %v995, %v1013
        %v1019 = vadd.f32 %v996, %v1011
        %v1020 = vstv %s998
        %v1021 = vmul.f32 %v1020, %v276
        %v1022 = vmul.f32 %v1020, %v272
        %v1023 = vmul.f32 %v1020, %v277
        %1027 = vrot.lane.b32.xlu0 %v1021, 64
        %v1028 = vpop.permute.xlu0 %1027
        %1029 = vrot.lane.b32.xlu0 %v1022, 64
        %v1030 = vpop.permute.xlu0 %1029
        %1031 = vrot.lane.b32.xlu0 %v1023, 64
        %v1032 = vpop.permute.xlu0 %1031
        %v1033 = vsel %vm430, %v1028, %v1030
        %v1034 = vsel %vm430, %v1030, %v1032
        %v1038 = vadd.f32 %v1017, %v1033
        %v1039 = vadd.f32 %v1018, %v1034
        %v1040 = vadd.f32 %v1019, %v1032
        %s1041 = sld [smem:[#allocation6 + $0x25]]
        %s1042 = sld [smem:[#allocation6 + $0x56]]
        %v1043 = vstv %s1041
        %v1044 = vmul.f32 %v1043, %v264
        %v1045 = vmul.f32 %v1043, %v260
        %v1046 = vmul.f32 %v1043, %v265
        %1050 = vrot.lane.b32.xlu0 %v1044, 48
        %v1051 = vpop.permute.xlu0 %1050
        %1052 = vrot.lane.b32.xlu0 %v1045, 48
        %v1053 = vpop.permute.xlu0 %1052
        %1054 = vrot.lane.b32.xlu0 %v1046, 48
        %v1055 = vpop.permute.xlu0 %1054
        %v1056 = vsel %vm471, %v1051, %v1053
        %v1057 = vsel %vm471, %v1053, %v1055
        %v1061 = vadd.f32 %v1038, %v1056
        %v1062 = vadd.f32 %v1039, %v1057
        %v1063 = vadd.f32 %v1040, %v1055
        %v1064 = vstv %s1042
        %v1065 = vmul.f32 %v1064, %v276
        %v1066 = vmul.f32 %v1064, %v272
        %v1067 = vmul.f32 %v1064, %v277
        %1071 = vrot.lane.b32.xlu0 %v1065, 48
        %v1072 = vpop.permute.xlu0 %1071
        %1073 = vrot.lane.b32.xlu0 %v1066, 48
        %v1074 = vpop.permute.xlu0 %1073
        %1075 = vrot.lane.b32.xlu0 %v1067, 48
        %v1076 = vpop.permute.xlu0 %1075
        %v1077 = vsel %vm471, %v1072, %v1074
        %v1078 = vsel %vm471, %v1074, %v1076
        %v1082 = vadd.f32 %v1061, %v1077
        %v1083 = vadd.f32 %v1062, %v1078
        %v1084 = vadd.f32 %v1063, %v1076
        %s1085 = sld [smem:[#allocation6 + $0x2c]]
        %s1086 = sld [smem:[#allocation6 + $0x5d]]
        %v1087 = vstv %s1085
        %v1088 = vmul.f32 %v1087, %v264
        %v1089 = vmul.f32 %v1087, %v260
        %v1090 = vmul.f32 %v1087, %v265
        %1094 = vrot.lane.b32.xlu0 %v1088, 32
        %v1095 = vpop.permute.xlu0 %1094
        %1096 = vrot.lane.b32.xlu0 %v1089, 32
        %v1097 = vpop.permute.xlu0 %1096
        %1098 = vrot.lane.b32.xlu0 %v1090, 32
        %v1099 = vpop.permute.xlu0 %1098
        %v1100 = vsel %vm512, %v1095, %v1097
        %v1101 = vsel %vm512, %v1097, %v1099
        %v1105 = vadd.f32 %v1082, %v1100
        %v1106 = vadd.f32 %v1083, %v1101
        %v1107 = vadd.f32 %v1084, %v1099
        %v1108 = vstv %s1086
        %v1109 = vmul.f32 %v1108, %v276
        %v1110 = vmul.f32 %v1108, %v272
        %v1111 = vmul.f32 %v1108, %v277
        %1115 = vrot.lane.b32.xlu0 %v1109, 32
        %v1116 = vpop.permute.xlu0 %1115
        %1117 = vrot.lane.b32.xlu0 %v1110, 32
        %v1118 = vpop.permute.xlu0 %1117
        %1119 = vrot.lane.b32.xlu0 %v1111, 32
        %v1120 = vpop.permute.xlu0 %1119
        %v1121 = vsel %vm512, %v1116, %v1118
        %v1122 = vsel %vm512, %v1118, %v1120
        %v1126 = vadd.f32 %v1105, %v1121
        %v1127 = vadd.f32 %v1106, %v1122
        %v1128 = vadd.f32 %v1107, %v1120
        %v1132 = vrot.slane %v1126, 6
        %v1133 = vrot.slane %v1127, 6
        %v1134 = vrot.slane %v1128, 6
        %1135 = vrot.lane.b32.xlu0 %v1132, 126
        %v1136 = vpop.permute.xlu0 %1135
        %1137 = vrot.lane.b32.xlu0 %v1133, 126
        %v1138 = vpop.permute.xlu0 %1137
        %1139 = vrot.lane.b32.xlu0 %v1134, 126
        %v1140 = vpop.permute.xlu0 %1139
        %vm1141 = vcmask 1031168
        %v1142 = vsel %vm1141, %v1136, %v1138
        %v1143 = vsel %vm1141, %v1138, %v1140
        %v1146 = vmul.f32 %v278, %v1142
        %v1147 = vmul.f32 %v279, %v1143
        %v1150 = vrot.slane %v1146, 2
        %v1151 = vrot.slane %v1147, 2
        %v1154 = vadd.f32 %v847, %v1150
        %v1155 = vadd.f32 %v848, %v1151
        %s1156 = sld [smem:[#allocation6 + $0x3]]
        %s1157 = sld [smem:[#allocation6 + $0x34]]
        %v1158 = vstv %s1156
        %v1159 = vmul.f32 %v1158, %v264
        %v1160 = vmul.f32 %v1158, %v260
        %v1161 = vmul.f32 %v1158, %v265
        %v1162 = vadd.f32 %v1159, 0.0
        %v1163 = vadd.f32 %v1160, 0.0
        %v1164 = vadd.f32 %v1161, 0.0
        %v1165 = vstv %s1157
        %v1166 = vmul.f32 %v1165, %v276
        %v1167 = vmul.f32 %v1165, %v272
        %v1168 = vmul.f32 %v1165, %v277
        %v1169 = vadd.f32 %v1162, %v1166
        %v1170 = vadd.f32 %v1163, %v1167
        %v1171 = vadd.f32 %v1164, %v1168
        %s1172 = sld [smem:[#allocation6 + $0xa]]
        %s1173 = sld [smem:[#allocation6 + $0x3b]]
        %v1174 = vstv %s1172
        %v1175 = vmul.f32 %v1174, %v264
        %v1176 = vmul.f32 %v1174, %v260
        %v1177 = vmul.f32 %v1174, %v265
        %1181 = vrot.lane.b32.xlu0 %v1175, 112
        %v1182 = vpop.permute.xlu0 %1181
        %1183 = vrot.lane.b32.xlu0 %v1176, 112
        %v1184 = vpop.permute.xlu0 %1183
        %1185 = vrot.lane.b32.xlu0 %v1177, 112
        %v1186 = vpop.permute.xlu0 %1185
        %v1187 = vsel %vm307, %v1182, %v1184
        %v1188 = vsel %vm307, %v1184, %v1186
        %v1192 = vadd.f32 %v1169, %v1187
        %v1193 = vadd.f32 %v1170, %v1188
        %v1194 = vadd.f32 %v1171, %v1186
        %v1195 = vstv %s1173
        %v1196 = vmul.f32 %v1195, %v276
        %v1197 = vmul.f32 %v1195, %v272
        %v1198 = vmul.f32 %v1195, %v277
        %1202 = vrot.lane.b32.xlu0 %v1196, 112
        %v1203 = vpop.permute.xlu0 %1202
        %1204 = vrot.lane.b32.xlu0 %v1197, 112
        %v1205 = vpop.permute.xlu0 %1204
        %1206 = vrot.lane.b32.xlu0 %v1198, 112
        %v1207 = vpop.permute.xlu0 %1206
        %v1208 = vsel %vm307, %v1203, %v1205
        %v1209 = vsel %vm307, %v1205, %v1207
        %v1213 = vadd.f32 %v1192, %v1208
        %v1214 = vadd.f32 %v1193, %v1209
        %v1215 = vadd.f32 %v1194, %v1207
        %s1216 = sld [smem:[#allocation6 + $0x11]]
        %s1217 = sld [smem:[#allocation6 + $0x42]]
        %v1218 = vstv %s1216
        %v1219 = vmul.f32 %v1218, %v264
        %v1220 = vmul.f32 %v1218, %v260
        %v1221 = vmul.f32 %v1218, %v265
        %1225 = vrot.lane.b32.xlu0 %v1219, 96
        %v1226 = vpop.permute.xlu0 %1225
        %1227 = vrot.lane.b32.xlu0 %v1220, 96
        %v1228 = vpop.permute.xlu0 %1227
        %1229 = vrot.lane.b32.xlu0 %v1221, 96
        %v1230 = vpop.permute.xlu0 %1229
        %v1231 = vsel %vm348, %v1226, %v1228
        %v1232 = vsel %vm348, %v1228, %v1230
        %v1236 = vadd.f32 %v1213, %v1231
        %v1237 = vadd.f32 %v1214, %v1232
        %v1238 = vadd.f32 %v1215, %v1230
        %v1239 = vstv %s1217
        %v1240 = vmul.f32 %v1239, %v276
        %v1241 = vmul.f32 %v1239, %v272
        %v1242 = vmul.f32 %v1239, %v277
        %1246 = vrot.lane.b32.xlu0 %v1240, 96
        %v1247 = vpop.permute.xlu0 %1246
        %1248 = vrot.lane.b32.xlu0 %v1241, 96
        %v1249 = vpop.permute.xlu0 %1248
        %1250 = vrot.lane.b32.xlu0 %v1242, 96
        %v1251 = vpop.permute.xlu0 %1250
        %v1252 = vsel %vm348, %v1247, %v1249
        %v1253 = vsel %vm348, %v1249, %v1251
        %v1257 = vadd.f32 %v1236, %v1252
        %v1258 = vadd.f32 %v1237, %v1253
        %v1259 = vadd.f32 %v1238, %v1251
        %s1260 = sld [smem:[#allocation6 + $0x18]]
        %s1261 = sld [smem:[#allocation6 + $0x49]]
        %v1262 = vstv %s1260
        %v1263 = vmul.f32 %v1262, %v264
        %v1264 = vmul.f32 %v1262, %v260
        %v1265 = vmul.f32 %v1262, %v265
        %1269 = vrot.lane.b32.xlu0 %v1263, 80
        %v1270 = vpop.permute.xlu0 %1269
        %1271 = vrot.lane.b32.xlu0 %v1264, 80
        %v1272 = vpop.permute.xlu0 %1271
        %1273 = vrot.lane.b32.xlu0 %v1265, 80
        %v1274 = vpop.permute.xlu0 %1273
        %v1275 = vsel %vm389, %v1270, %v1272
        %v1276 = vsel %vm389, %v1272, %v1274
        %v1280 = vadd.f32 %v1257, %v1275
        %v1281 = vadd.f32 %v1258, %v1276
        %v1282 = vadd.f32 %v1259, %v1274
        %v1283 = vstv %s1261
        %v1284 = vmul.f32 %v1283, %v276
        %v1285 = vmul.f32 %v1283, %v272
        %v1286 = vmul.f32 %v1283, %v277
        %1290 = vrot.lane.b32.xlu0 %v1284, 80
        %v1291 = vpop.permute.xlu0 %1290
        %1292 = vrot.lane.b32.xlu0 %v1285, 80
        %v1293 = vpop.permute.xlu0 %1292
        %1294 = vrot.lane.b32.xlu0 %v1286, 80
        %v1295 = vpop.permute.xlu0 %1294
        %v1296 = vsel %vm389, %v1291, %v1293
        %v1297 = vsel %vm389, %v1293, %v1295
        %v1301 = vadd.f32 %v1280, %v1296
        %v1302 = vadd.f32 %v1281, %v1297
        %v1303 = vadd.f32 %v1282, %v1295
        %s1304 = sld [smem:[#allocation6 + $0x1f]]
        %s1305 = sld [smem:[#allocation6 + $0x50]]
        %v1306 = vstv %s1304
        %v1307 = vmul.f32 %v1306, %v264
        %v1308 = vmul.f32 %v1306, %v260
        %v1309 = vmul.f32 %v1306, %v265
        %1313 = vrot.lane.b32.xlu0 %v1307, 64
        %v1314 = vpop.permute.xlu0 %1313
        %1315 = vrot.lane.b32.xlu0 %v1308, 64
        %v1316 = vpop.permute.xlu0 %1315
        %1317 = vrot.lane.b32.xlu0 %v1309, 64
        %v1318 = vpop.permute.xlu0 %1317
        %v1319 = vsel %vm430, %v1314, %v1316
        %v1320 = vsel %vm430, %v1316, %v1318
        %v1324 = vadd.f32 %v1301, %v1319
        %v1325 = vadd.f32 %v1302, %v1320
        %v1326 = vadd.f32 %v1303, %v1318
        %v1327 = vstv %s1305
        %v1328 = vmul.f32 %v1327, %v276
        %v1329 = vmul.f32 %v1327, %v272
        %v1330 = vmul.f32 %v1327, %v277
        %1334 = vrot.lane.b32.xlu0 %v1328, 64
        %v1335 = vpop.permute.xlu0 %1334
        %1336 = vrot.lane.b32.xlu0 %v1329, 64
        %v1337 = vpop.permute.xlu0 %1336
        %1338 = vrot.lane.b32.xlu0 %v1330, 64
        %v1339 = vpop.permute.xlu0 %1338
        %v1340 = vsel %vm430, %v1335, %v1337
        %v1341 = vsel %vm430, %v1337, %v1339
        %v1345 = vadd.f32 %v1324, %v1340
        %v1346 = vadd.f32 %v1325, %v1341
        %v1347 = vadd.f32 %v1326, %v1339
        %s1348 = sld [smem:[#allocation6 + $0x26]]
        %s1349 = sld [smem:[#allocation6 + $0x57]]
        %v1350 = vstv %s1348
        %v1351 = vmul.f32 %v1350, %v264
        %v1352 = vmul.f32 %v1350, %v260
        %v1353 = vmul.f32 %v1350, %v265
        %1357 = vrot.lane.b32.xlu0 %v1351, 48
        %v1358 = vpop.permute.xlu0 %1357
        %1359 = vrot.lane.b32.xlu0 %v1352, 48
        %v1360 = vpop.permute.xlu0 %1359
        %1361 = vrot.lane.b32.xlu0 %v1353, 48
        %v1362 = vpop.permute.xlu0 %1361
        %v1363 = vsel %vm471, %v1358, %v1360
        %v1364 = vsel %vm471, %v1360, %v1362
        %v1368 = vadd.f32 %v1345, %v1363
        %v1369 = vadd.f32 %v1346, %v1364
        %v1370 = vadd.f32 %v1347, %v1362
        %v1371 = vstv %s1349
        %v1372 = vmul.f32 %v1371, %v276
        %v1373 = vmul.f32 %v1371, %v272
        %v1374 = vmul.f32 %v1371, %v277
        %1378 = vrot.lane.b32.xlu0 %v1372, 48
        %v1379 = vpop.permute.xlu0 %1378
        %1380 = vrot.lane.b32.xlu0 %v1373, 48
        %v1381 = vpop.permute.xlu0 %1380
        %1382 = vrot.lane.b32.xlu0 %v1374, 48
        %v1383 = vpop.permute.xlu0 %1382
        %v1384 = vsel %vm471, %v1379, %v1381
        %v1385 = vsel %vm471, %v1381, %v1383
        %v1389 = vadd.f32 %v1368, %v1384
        %v1390 = vadd.f32 %v1369, %v1385
        %v1391 = vadd.f32 %v1370, %v1383
        %s1392 = sld [smem:[#allocation6 + $0x2d]]
        %s1393 = sld [smem:[#allocation6 + $0x5e]]
        %v1394 = vstv %s1392
        %v1395 = vmul.f32 %v1394, %v264
        %v1396 = vmul.f32 %v1394, %v260
        %v1397 = vmul.f32 %v1394, %v265
        %1401 = vrot.lane.b32.xlu0 %v1395, 32
        %v1402 = vpop.permute.xlu0 %1401
        %1403 = vrot.lane.b32.xlu0 %v1396, 32
        %v1404 = vpop.permute.xlu0 %1403
        %1405 = vrot.lane.b32.xlu0 %v1397, 32
        %v1406 = vpop.permute.xlu0 %1405
        %v1407 = vsel %vm512, %v1402, %v1404
        %v1408 = vsel %vm512, %v1404, %v1406
        %v1412 = vadd.f32 %v1389, %v1407
        %v1413 = vadd.f32 %v1390, %v1408
        %v1414 = vadd.f32 %v1391, %v1406
        %v1415 = vstv %s1393
        %v1416 = vmul.f32 %v1415, %v276
        %v1417 = vmul.f32 %v1415, %v272
        %v1418 = vmul.f32 %v1415, %v277
        %1422 = vrot.lane.b32.xlu0 %v1416, 32
        %v1423 = vpop.permute.xlu0 %1422
        %1424 = vrot.lane.b32.xlu0 %v1417, 32
        %v1425 = vpop.permute.xlu0 %1424
        %1426 = vrot.lane.b32.xlu0 %v1418, 32
        %v1427 = vpop.permute.xlu0 %1426
        %v1428 = vsel %vm512, %v1423, %v1425
        %v1429 = vsel %vm512, %v1425, %v1427
        %v1433 = vadd.f32 %v1412, %v1428
        %v1434 = vadd.f32 %v1413, %v1429
        %v1435 = vadd.f32 %v1414, %v1427
        %v1439 = vrot.slane %v1433, 5
        %v1440 = vrot.slane %v1434, 5
        %v1441 = vrot.slane %v1435, 5
        %1442 = vrot.lane.b32.xlu0 %v1439, 125
        %v1443 = vpop.permute.xlu0 %1442
        %1444 = vrot.lane.b32.xlu0 %v1440, 125
        %v1445 = vpop.permute.xlu0 %1444
        %1446 = vrot.lane.b32.xlu0 %v1441, 125
        %v1447 = vpop.permute.xlu0 %1446
        %vm1448 = vcmask 1022976
        %v1449 = vsel %vm1448, %v1443, %v1445
        %v1450 = vsel %vm1448, %v1445, %v1447
        %v1453 = vmul.f32 %v278, %v1449
        %v1454 = vmul.f32 %v279, %v1450
        %v1457 = vrot.slane %v1453, 3
        %v1458 = vrot.slane %v1454, 3
        %v1461 = vadd.f32 %v1154, %v1457
        %v1462 = vadd.f32 %v1155, %v1458
        %s1463 = sld [smem:[#allocation6 + $0x4]]
        %s1464 = sld [smem:[#allocation6 + $0x35]]
        %v1465 = vstv %s1463
        %v1466 = vmul.f32 %v1465, %v264
        %v1467 = vmul.f32 %v1465, %v260
        %v1468 = vmul.f32 %v1465, %v265
        %v1469 = vadd.f32 %v1466, 0.0
        %v1470 = vadd.f32 %v1467, 0.0
        %v1471 = vadd.f32 %v1468, 0.0
        %v1472 = vstv %s1464
        %v1473 = vmul.f32 %v1472, %v276
        %v1474 = vmul.f32 %v1472, %v272
        %v1475 = vmul.f32 %v1472, %v277
        %v1476 = vadd.f32 %v1469, %v1473
        %v1477 = vadd.f32 %v1470, %v1474
        %v1478 = vadd.f32 %v1471, %v1475
        %s1479 = sld [smem:[#allocation6 + $0xb]]
        %s1480 = sld [smem:[#allocation6 + $0x3c]]
        %v1481 = vstv %s1479
        %v1482 = vmul.f32 %v1481, %v264
        %v1483 = vmul.f32 %v1481, %v260
        %v1484 = vmul.f32 %v1481, %v265
        %1488 = vrot.lane.b32.xlu0 %v1482, 112
        %v1489 = vpop.permute.xlu0 %1488
        %1490 = vrot.lane.b32.xlu0 %v1483, 112
        %v1491 = vpop.permute.xlu0 %1490
        %1492 = vrot.lane.b32.xlu0 %v1484, 112
        %v1493 = vpop.permute.xlu0 %1492
        %v1494 = vsel %vm307, %v1489, %v1491
        %v1495 = vsel %vm307, %v1491, %v1493
        %v1499 = vadd.f32 %v1476, %v1494
        %v1500 = vadd.f32 %v1477, %v1495
        %v1501 = vadd.f32 %v1478, %v1493
        %v1502 = vstv %s1480
        %v1503 = vmul.f32 %v1502, %v276
        %v1504 = vmul.f32 %v1502, %v272
        %v1505 = vmul.f32 %v1502, %v277
        %1509 = vrot.lane.b32.xlu0 %v1503, 112
        %v1510 = vpop.permute.xlu0 %1509
        %1511 = vrot.lane.b32.xlu0 %v1504, 112
        %v1512 = vpop.permute.xlu0 %1511
        %1513 = vrot.lane.b32.xlu0 %v1505, 112
        %v1514 = vpop.permute.xlu0 %1513
        %v1515 = vsel %vm307, %v1510, %v1512
        %v1516 = vsel %vm307, %v1512, %v1514
        %v1520 = vadd.f32 %v1499, %v1515
        %v1521 = vadd.f32 %v1500, %v1516
        %v1522 = vadd.f32 %v1501, %v1514
        %s1523 = sld [smem:[#allocation6 + $0x12]]
        %s1524 = sld [smem:[#allocation6 + $0x43]]
        %v1525 = vstv %s1523
        %v1526 = vmul.f32 %v1525, %v264
        %v1527 = vmul.f32 %v1525, %v260
        %v1528 = vmul.f32 %v1525, %v265
        %1532 = vrot.lane.b32.xlu0 %v1526, 96
        %v1533 = vpop.permute.xlu0 %1532
        %1534 = vrot.lane.b32.xlu0 %v1527, 96
        %v1535 = vpop.permute.xlu0 %1534
        %1536 = vrot.lane.b32.xlu0 %v1528, 96
        %v1537 = vpop.permute.xlu0 %1536
        %v1538 = vsel %vm348, %v1533, %v1535
        %v1539 = vsel %vm348, %v1535, %v1537
        %v1543 = vadd.f32 %v1520, %v1538
        %v1544 = vadd.f32 %v1521, %v1539
        %v1545 = vadd.f32 %v1522, %v1537
        %v1546 = vstv %s1524
        %v1547 = vmul.f32 %v1546, %v276
        %v1548 = vmul.f32 %v1546, %v272
        %v1549 = vmul.f32 %v1546, %v277
        %1553 = vrot.lane.b32.xlu0 %v1547, 96
        %v1554 = vpop.permute.xlu0 %1553
        %1555 = vrot.lane.b32.xlu0 %v1548, 96
        %v1556 = vpop.permute.xlu0 %1555
        %1557 = vrot.lane.b32.xlu0 %v1549, 96
        %v1558 = vpop.permute.xlu0 %1557
        %v1559 = vsel %vm348, %v1554, %v1556
        %v1560 = vsel %vm348, %v1556, %v1558
        %v1564 = vadd.f32 %v1543, %v1559
        %v1565 = vadd.f32 %v1544, %v1560
        %v1566 = vadd.f32 %v1545, %v1558
        %s1567 = sld [smem:[#allocation6 + $0x19]]
        %s1568 = sld [smem:[#allocation6 + $0x4a]]
        %v1569 = vstv %s1567
        %v1570 = vmul.f32 %v1569, %v264
        %v1571 = vmul.f32 %v1569, %v260
        %v1572 = vmul.f32 %v1569, %v265
        %1576 = vrot.lane.b32.xlu0 %v1570, 80
        %v1577 = vpop.permute.xlu0 %1576
        %1578 = vrot.lane.b32.xlu0 %v1571, 80
        %v1579 = vpop.permute.xlu0 %1578
        %1580 = vrot.lane.b32.xlu0 %v1572, 80
        %v1581 = vpop.permute.xlu0 %1580
        %v1582 = vsel %vm389, %v1577, %v1579
        %v1583 = vsel %vm389, %v1579, %v1581
        %v1587 = vadd.f32 %v1564, %v1582
        %v1588 = vadd.f32 %v1565, %v1583
        %v1589 = vadd.f32 %v1566, %v1581
        %v1590 = vstv %s1568
        %v1591 = vmul.f32 %v1590, %v276
        %v1592 = vmul.f32 %v1590, %v272
        %v1593 = vmul.f32 %v1590, %v277
        %1597 = vrot.lane.b32.xlu0 %v1591, 80
        %v1598 = vpop.permute.xlu0 %1597
        %1599 = vrot.lane.b32.xlu0 %v1592, 80
        %v1600 = vpop.permute.xlu0 %1599
        %1601 = vrot.lane.b32.xlu0 %v1593, 80
        %v1602 = vpop.permute.xlu0 %1601
        %v1603 = vsel %vm389, %v1598, %v1600
        %v1604 = vsel %vm389, %v1600, %v1602
        %v1608 = vadd.f32 %v1587, %v1603
        %v1609 = vadd.f32 %v1588, %v1604
        %v1610 = vadd.f32 %v1589, %v1602
        %s1611 = sld [smem:[#allocation6 + $0x20]]
        %s1612 = sld [smem:[#allocation6 + $0x51]]
        %v1613 = vstv %s1611
        %v1614 = vmul.f32 %v1613, %v264
        %v1615 = vmul.f32 %v1613, %v260
        %v1616 = vmul.f32 %v1613, %v265
        %1620 = vrot.lane.b32.xlu0 %v1614, 64
        %v1621 = vpop.permute.xlu0 %1620
        %1622 = vrot.lane.b32.xlu0 %v1615, 64
        %v1623 = vpop.permute.xlu0 %1622
        %1624 = vrot.lane.b32.xlu0 %v1616, 64
        %v1625 = vpop.permute.xlu0 %1624
        %v1626 = vsel %vm430, %v1621, %v1623
        %v1627 = vsel %vm430, %v1623, %v1625
        %v1631 = vadd.f32 %v1608, %v1626
        %v1632 = vadd.f32 %v1609, %v1627
        %v1633 = vadd.f32 %v1610, %v1625
        %v1634 = vstv %s1612
        %v1635 = vmul.f32 %v1634, %v276
        %v1636 = vmul.f32 %v1634, %v272
        %v1637 = vmul.f32 %v1634, %v277
        %1641 = vrot.lane.b32.xlu0 %v1635, 64
        %v1642 = vpop.permute.xlu0 %1641
        %1643 = vrot.lane.b32.xlu0 %v1636, 64
        %v1644 = vpop.permute.xlu0 %1643
        %1645 = vrot.lane.b32.xlu0 %v1637, 64
        %v1646 = vpop.permute.xlu0 %1645
        %v1647 = vsel %vm430, %v1642, %v1644
        %v1648 = vsel %vm430, %v1644, %v1646
        %v1652 = vadd.f32 %v1631, %v1647
        %v1653 = vadd.f32 %v1632, %v1648
        %v1654 = vadd.f32 %v1633, %v1646
        %s1655 = sld [smem:[#allocation6 + $0x27]]
        %s1656 = sld [smem:[#allocation6 + $0x58]]
        %v1657 = vstv %s1655
        %v1658 = vmul.f32 %v1657, %v264
        %v1659 = vmul.f32 %v1657, %v260
        %v1660 = vmul.f32 %v1657, %v265
        %1664 = vrot.lane.b32.xlu0 %v1658, 48
        %v1665 = vpop.permute.xlu0 %1664
        %1666 = vrot.lane.b32.xlu0 %v1659, 48
        %v1667 = vpop.permute.xlu0 %1666
        %1668 = vrot.lane.b32.xlu0 %v1660, 48
        %v1669 = vpop.permute.xlu0 %1668
        %v1670 = vsel %vm471, %v1665, %v1667
        %v1671 = vsel %vm471, %v1667, %v1669
        %v1675 = vadd.f32 %v1652, %v1670
        %v1676 = vadd.f32 %v1653, %v1671
        %v1677 = vadd.f32 %v1654, %v1669
        %v1678 = vstv %s1656
        %v1679 = vmul.f32 %v1678, %v276
        %v1680 = vmul.f32 %v1678, %v272
        %v1681 = vmul.f32 %v1678, %v277
        %1685 = vrot.lane.b32.xlu0 %v1679, 48
        %v1686 = vpop.permute.xlu0 %1685
        %1687 = vrot.lane.b32.xlu0 %v1680, 48
        %v1688 = vpop.permute.xlu0 %1687
        %1689 = vrot.lane.b32.xlu0 %v1681, 48
        %v1690 = vpop.permute.xlu0 %1689
        %v1691 = vsel %vm471, %v1686, %v1688
        %v1692 = vsel %vm471, %v1688, %v1690
        %v1696 = vadd.f32 %v1675, %v1691
        %v1697 = vadd.f32 %v1676, %v1692
        %v1698 = vadd.f32 %v1677, %v1690
        %s1699 = sld [smem:[#allocation6 + $0x2e]]
        %s1700 = sld [smem:[#allocation6 + $0x5f]]
        %v1701 = vstv %s1699
        %v1702 = vmul.f32 %v1701, %v264
        %v1703 = vmul.f32 %v1701, %v260
        %v1704 = vmul.f32 %v1701, %v265
        %1708 = vrot.lane.b32.xlu0 %v1702, 32
        %v1709 = vpop.permute.xlu0 %1708
        %1710 = vrot.lane.b32.xlu0 %v1703, 32
        %v1711 = vpop.permute.xlu0 %1710
        %1712 = vrot.lane.b32.xlu0 %v1704, 32
        %v1713 = vpop.permute.xlu0 %1712
        %v1714 = vsel %vm512, %v1709, %v1711
        %v1715 = vsel %vm512, %v1711, %v1713
        %v1719 = vadd.f32 %v1696, %v1714
        %v1720 = vadd.f32 %v1697, %v1715
        %v1721 = vadd.f32 %v1698, %v1713
        %v1722 = vstv %s1700
        %v1723 = vmul.f32 %v1722, %v276
        %v1724 = vmul.f32 %v1722, %v272
        %v1725 = vmul.f32 %v1722, %v277
        %1729 = vrot.lane.b32.xlu0 %v1723, 32
        %v1730 = vpop.permute.xlu0 %1729
        %1731 = vrot.lane.b32.xlu0 %v1724, 32
        %v1732 = vpop.permute.xlu0 %1731
        %1733 = vrot.lane.b32.xlu0 %v1725, 32
        %v1734 = vpop.permute.xlu0 %1733
        %v1735 = vsel %vm512, %v1730, %v1732
        %v1736 = vsel %vm512, %v1732, %v1734
        %v1740 = vadd.f32 %v1719, %v1735
        %v1741 = vadd.f32 %v1720, %v1736
        %v1742 = vadd.f32 %v1721, %v1734
        %v1746 = vrot.slane %v1740, 4
        %v1747 = vrot.slane %v1741, 4
        %v1748 = vrot.slane %v1742, 4
        %1749 = vrot.lane.b32.xlu0 %v1746, 124
        %v1750 = vpop.permute.xlu0 %1749
        %1751 = vrot.lane.b32.xlu0 %v1747, 124
        %v1752 = vpop.permute.xlu0 %1751
        %1753 = vrot.lane.b32.xlu0 %v1748, 124
        %v1754 = vpop.permute.xlu0 %1753
        %vm1755 = vcmask 1014784
        %v1756 = vsel %vm1755, %v1750, %v1752
        %v1757 = vsel %vm1755, %v1752, %v1754
        %v1760 = vmul.f32 %v278, %v1756
        %v1761 = vmul.f32 %v279, %v1757
        %v1764 = vrot.slane %v1760, 4
        %v1765 = vrot.slane %v1761, 4
        %v1768 = vadd.f32 %v1461, %v1764
        %v1769 = vadd.f32 %v1462, %v1765
        %s1770 = sld [smem:[#allocation6 + $0x5]]
        %s1771 = sld [smem:[#allocation6 + $0x36]]
        %v1772 = vstv %s1770
        %v1773 = vmul.f32 %v1772, %v264
        %v1774 = vmul.f32 %v1772, %v260
        %v1775 = vmul.f32 %v1772, %v265
        %v1776 = vadd.f32 %v1773, 0.0
        %v1777 = vadd.f32 %v1774, 0.0
        %v1778 = vadd.f32 %v1775, 0.0
        %v1779 = vstv %s1771
        %v1780 = vmul.f32 %v1779, %v276
        %v1781 = vmul.f32 %v1779, %v272
        %v1782 = vmul.f32 %v1779, %v277
        %v1783 = vadd.f32 %v1776, %v1780
        %v1784 = vadd.f32 %v1777, %v1781
        %v1785 = vadd.f32 %v1778, %v1782
        %s1786 = sld [smem:[#allocation6 + $0xc]]
        %s1787 = sld [smem:[#allocation6 + $0x3d]]
        %v1788 = vstv %s1786
        %v1789 = vmul.f32 %v1788, %v264
        %v1790 = vmul.f32 %v1788, %v260
        %v1791 = vmul.f32 %v1788, %v265
        %1795 = vrot.lane.b32.xlu0 %v1789, 112
        %v1796 = vpop.permute.xlu0 %1795
        %1797 = vrot.lane.b32.xlu0 %v1790, 112
        %v1798 = vpop.permute.xlu0 %1797
        %1799 = vrot.lane.b32.xlu0 %v1791, 112
        %v1800 = vpop.permute.xlu0 %1799
        %v1801 = vsel %vm307, %v1796, %v1798
        %v1802 = vsel %vm307, %v1798, %v1800
        %v1806 = vadd.f32 %v1783, %v1801
        %v1807 = vadd.f32 %v1784, %v1802
        %v1808 = vadd.f32 %v1785, %v1800
        %v1809 = vstv %s1787
        %v1810 = vmul.f32 %v1809, %v276
        %v1811 = vmul.f32 %v1809, %v272
        %v1812 = vmul.f32 %v1809, %v277
        %1816 = vrot.lane.b32.xlu0 %v1810, 112
        %v1817 = vpop.permute.xlu0 %1816
        %1818 = vrot.lane.b32.xlu0 %v1811, 112
        %v1819 = vpop.permute.xlu0 %1818
        %1820 = vrot.lane.b32.xlu0 %v1812, 112
        %v1821 = vpop.permute.xlu0 %1820
        %v1822 = vsel %vm307, %v1817, %v1819
        %v1823 = vsel %vm307, %v1819, %v1821
        %v1827 = vadd.f32 %v1806, %v1822
        %v1828 = vadd.f32 %v1807, %v1823
        %v1829 = vadd.f32 %v1808, %v1821
        %s1830 = sld [smem:[#allocation6 + $0x13]]
        %s1831 = sld [smem:[#allocation6 + $0x44]]
        %v1832 = vstv %s1830
        %v1833 = vmul.f32 %v1832, %v264
        %v1834 = vmul.f32 %v1832, %v260
        %v1835 = vmul.f32 %v1832, %v265
        %1839 = vrot.lane.b32.xlu0 %v1833, 96
        %v1840 = vpop.permute.xlu0 %1839
        %1841 = vrot.lane.b32.xlu0 %v1834, 96
        %v1842 = vpop.permute.xlu0 %1841
        %1843 = vrot.lane.b32.xlu0 %v1835, 96
        %v1844 = vpop.permute.xlu0 %1843
        %v1845 = vsel %vm348, %v1840, %v1842
        %v1846 = vsel %vm348, %v1842, %v1844
        %v1850 = vadd.f32 %v1827, %v1845
        %v1851 = vadd.f32 %v1828, %v1846
        %v1852 = vadd.f32 %v1829, %v1844
        %v1853 = vstv %s1831
        %v1854 = vmul.f32 %v1853, %v276
        %v1855 = vmul.f32 %v1853, %v272
        %v1856 = vmul.f32 %v1853, %v277
        %1860 = vrot.lane.b32.xlu0 %v1854, 96
        %v1861 = vpop.permute.xlu0 %1860
        %1862 = vrot.lane.b32.xlu0 %v1855, 96
        %v1863 = vpop.permute.xlu0 %1862
        %1864 = vrot.lane.b32.xlu0 %v1856, 96
        %v1865 = vpop.permute.xlu0 %1864
        %v1866 = vsel %vm348, %v1861, %v1863
        %v1867 = vsel %vm348, %v1863, %v1865
        %v1871 = vadd.f32 %v1850, %v1866
        %v1872 = vadd.f32 %v1851, %v1867
        %v1873 = vadd.f32 %v1852, %v1865
        %s1874 = sld [smem:[#allocation6 + $0x1a]]
        %s1875 = sld [smem:[#allocation6 + $0x4b]]
        %v1876 = vstv %s1874
        %v1877 = vmul.f32 %v1876, %v264
        %v1878 = vmul.f32 %v1876, %v260
        %v1879 = vmul.f32 %v1876, %v265
        %1883 = vrot.lane.b32.xlu0 %v1877, 80
        %v1884 = vpop.permute.xlu0 %1883
        %1885 = vrot.lane.b32.xlu0 %v1878, 80
        %v1886 = vpop.permute.xlu0 %1885
        %1887 = vrot.lane.b32.xlu0 %v1879, 80
        %v1888 = vpop.permute.xlu0 %1887
        %v1889 = vsel %vm389, %v1884, %v1886
        %v1890 = vsel %vm389, %v1886, %v1888
        %v1894 = vadd.f32 %v1871, %v1889
        %v1895 = vadd.f32 %v1872, %v1890
        %v1896 = vadd.f32 %v1873, %v1888
        %v1897 = vstv %s1875
        %v1898 = vmul.f32 %v1897, %v276
        %v1899 = vmul.f32 %v1897, %v272
        %v1900 = vmul.f32 %v1897, %v277
        %1904 = vrot.lane.b32.xlu0 %v1898, 80
        %v1905 = vpop.permute.xlu0 %1904
        %1906 = vrot.lane.b32.xlu0 %v1899, 80
        %v1907 = vpop.permute.xlu0 %1906
        %1908 = vrot.lane.b32.xlu0 %v1900, 80
        %v1909 = vpop.permute.xlu0 %1908
        %v1910 = vsel %vm389, %v1905, %v1907
        %v1911 = vsel %vm389, %v1907, %v1909
        %v1915 = vadd.f32 %v1894, %v1910
        %v1916 = vadd.f32 %v1895, %v1911
        %v1917 = vadd.f32 %v1896, %v1909
        %s1918 = sld [smem:[#allocation6 + $0x21]]
        %s1919 = sld [smem:[#allocation6 + $0x52]]
        %v1920 = vstv %s1918
        %v1921 = vmul.f32 %v1920, %v264
        %v1922 = vmul.f32 %v1920, %v260
        %v1923 = vmul.f32 %v1920, %v265
        %1927 = vrot.lane.b32.xlu0 %v1921, 64
        %v1928 = vpop.permute.xlu0 %1927
        %1929 = vrot.lane.b32.xlu0 %v1922, 64
        %v1930 = vpop.permute.xlu0 %1929
        %1931 = vrot.lane.b32.xlu0 %v1923, 64
        %v1932 = vpop.permute.xlu0 %1931
        %v1933 = vsel %vm430, %v1928, %v1930
        %v1934 = vsel %vm430, %v1930, %v1932
        %v1938 = vadd.f32 %v1915, %v1933
        %v1939 = vadd.f32 %v1916, %v1934
        %v1940 = vadd.f32 %v1917, %v1932
        %v1941 = vstv %s1919
        %v1942 = vmul.f32 %v1941, %v276
        %v1943 = vmul.f32 %v1941, %v272
        %v1944 = vmul.f32 %v1941, %v277
        %1948 = vrot.lane.b32.xlu0 %v1942, 64
        %v1949 = vpop.permute.xlu0 %1948
        %1950 = vrot.lane.b32.xlu0 %v1943, 64
        %v1951 = vpop.permute.xlu0 %1950
        %1952 = vrot.lane.b32.xlu0 %v1944, 64
        %v1953 = vpop.permute.xlu0 %1952
        %v1954 = vsel %vm430, %v1949, %v1951
        %v1955 = vsel %vm430, %v1951, %v1953
        %v1959 = vadd.f32 %v1938, %v1954
        %v1960 = vadd.f32 %v1939, %v1955
        %v1961 = vadd.f32 %v1940, %v1953
        %s1962 = sld [smem:[#allocation6 + $0x28]]
        %s1963 = sld [smem:[#allocation6 + $0x59]]
        %v1964 = vstv %s1962
        %v1965 = vmul.f32 %v1964, %v264
        %v1966 = vmul.f32 %v1964, %v260
        %v1967 = vmul.f32 %v1964, %v265
        %1971 = vrot.lane.b32.xlu0 %v1965, 48
        %v1972 = vpop.permute.xlu0 %1971
        %1973 = vrot.lane.b32.xlu0 %v1966, 48
        %v1974 = vpop.permute.xlu0 %1973
        %1975 = vrot.lane.b32.xlu0 %v1967, 48
        %v1976 = vpop.permute.xlu0 %1975
        %v1977 = vsel %vm471, %v1972, %v1974
        %v1978 = vsel %vm471, %v1974, %v1976
        %v1982 = vadd.f32 %v1959, %v1977
        %v1983 = vadd.f32 %v1960, %v1978
        %v1984 = vadd.f32 %v1961, %v1976
        %v1985 = vstv %s1963
        %v1986 = vmul.f32 %v1985, %v276
        %v1987 = vmul.f32 %v1985, %v272
        %v1988 = vmul.f32 %v1985, %v277
        %1992 = vrot.lane.b32.xlu0 %v1986, 48
        %v1993 = vpop.permute.xlu0 %1992
        %1994 = vrot.lane.b32.xlu0 %v1987, 48
        %v1995 = vpop.permute.xlu0 %1994
        %1996 = vrot.lane.b32.xlu0 %v1988, 48
        %v1997 = vpop.permute.xlu0 %1996
        %v1998 = vsel %vm471, %v1993, %v1995
        %v1999 = vsel %vm471, %v1995, %v1997
        %v2003 = vadd.f32 %v1982, %v1998
        %v2004 = vadd.f32 %v1983, %v1999
        %v2005 = vadd.f32 %v1984, %v1997
        %s2006 = sld [smem:[#allocation6 + $0x2f]]
        %s2007 = sld [smem:[#allocation6 + $0x60]]
        %v2008 = vstv %s2006
        %v2009 = vmul.f32 %v2008, %v264
        %v2010 = vmul.f32 %v2008, %v260
        %v2011 = vmul.f32 %v2008, %v265
        %2015 = vrot.lane.b32.xlu0 %v2009, 32
        %v2016 = vpop.permute.xlu0 %2015
        %2017 = vrot.lane.b32.xlu0 %v2010, 32
        %v2018 = vpop.permute.xlu0 %2017
        %2019 = vrot.lane.b32.xlu0 %v2011, 32
        %v2020 = vpop.permute.xlu0 %2019
        %v2021 = vsel %vm512, %v2016, %v2018
        %v2022 = vsel %vm512, %v2018, %v2020
        %v2026 = vadd.f32 %v2003, %v2021
        %v2027 = vadd.f32 %v2004, %v2022
        %v2028 = vadd.f32 %v2005, %v2020
        %v2029 = vstv %s2007
        %v2030 = vmul.f32 %v2029, %v276
        %v2031 = vmul.f32 %v2029, %v272
        %v2032 = vmul.f32 %v2029, %v277
        %2036 = vrot.lane.b32.xlu0 %v2030, 32
        %v2037 = vpop.permute.xlu0 %2036
        %2038 = vrot.lane.b32.xlu0 %v2031, 32
        %v2039 = vpop.permute.xlu0 %2038
        %2040 = vrot.lane.b32.xlu0 %v2032, 32
        %v2041 = vpop.permute.xlu0 %2040
        %v2042 = vsel %vm512, %v2037, %v2039
        %v2043 = vsel %vm512, %v2039, %v2041
        %v2047 = vadd.f32 %v2026, %v2042
        %v2048 = vadd.f32 %v2027, %v2043
        %v2049 = vadd.f32 %v2028, %v2041
        %v2053 = vrot.slane %v2047, 3
        %v2054 = vrot.slane %v2048, 3
        %v2055 = vrot.slane %v2049, 3
        %2056 = vrot.lane.b32.xlu0 %v2053, 123
        %v2057 = vpop.permute.xlu0 %2056
        %2058 = vrot.lane.b32.xlu0 %v2054, 123
        %v2059 = vpop.permute.xlu0 %2058
        %2060 = vrot.lane.b32.xlu0 %v2055, 123
        %v2061 = vpop.permute.xlu0 %2060
        %vm2062 = vcmask 1006592
        %v2063 = vsel %vm2062, %v2057, %v2059
        %v2064 = vsel %vm2062, %v2059, %v2061
        %v2067 = vmul.f32 %v278, %v2063
        %v2068 = vmul.f32 %v279, %v2064
        %v2071 = vrot.slane %v2067, 5
        %v2072 = vrot.slane %v2068, 5
        %v2075 = vadd.f32 %v1768, %v2071
        %v2076 = vadd.f32 %v1769, %v2072
        %s2077 = sld [smem:[#allocation6 + $0x6]]
        %s2078 = sld [smem:[#allocation6 + $0x37]]
        %v2079 = vstv %s2077
        %v2080 = vmul.f32 %v2079, %v264
        %v2081 = vmul.f32 %v2079, %v260
        %v2082 = vmul.f32 %v2079, %v265
        %v2083 = vadd.f32 %v2080, 0.0
        %v2084 = vadd.f32 %v2081, 0.0
        %v2085 = vadd.f32 %v2082, 0.0
        %v2086 = vstv %s2078
        %v2087 = vmul.f32 %v2086, %v276
        %v2088 = vmul.f32 %v2086, %v272
        %v2089 = vmul.f32 %v2086, %v277
        %v2090 = vadd.f32 %v2083, %v2087
        %v2091 = vadd.f32 %v2084, %v2088
        %v2092 = vadd.f32 %v2085, %v2089
        %s2093 = sld [smem:[#allocation6 + $0xd]]
        %s2094 = sld [smem:[#allocation6 + $0x3e]]
        %v2095 = vstv %s2093
        %v2096 = vmul.f32 %v2095, %v264
        %v2097 = vmul.f32 %v2095, %v260
        %v2098 = vmul.f32 %v2095, %v265
        %2102 = vrot.lane.b32.xlu0 %v2096, 112
        %v2103 = vpop.permute.xlu0 %2102
        %2104 = vrot.lane.b32.xlu0 %v2097, 112
        %v2105 = vpop.permute.xlu0 %2104
        %2106 = vrot.lane.b32.xlu0 %v2098, 112
        %v2107 = vpop.permute.xlu0 %2106
        %v2108 = vsel %vm307, %v2103, %v2105
        %v2109 = vsel %vm307, %v2105, %v2107
        %v2113 = vadd.f32 %v2090, %v2108
        %v2114 = vadd.f32 %v2091, %v2109
        %v2115 = vadd.f32 %v2092, %v2107
        %v2116 = vstv %s2094
        %v2117 = vmul.f32 %v2116, %v276
        %v2118 = vmul.f32 %v2116, %v272
        %v2119 = vmul.f32 %v2116, %v277
        %2123 = vrot.lane.b32.xlu0 %v2117, 112
        %v2124 = vpop.permute.xlu0 %2123
        %2125 = vrot.lane.b32.xlu0 %v2118, 112
        %v2126 = vpop.permute.xlu0 %2125
        %2127 = vrot.lane.b32.xlu0 %v2119, 112
        %v2128 = vpop.permute.xlu0 %2127
        %v2129 = vsel %vm307, %v2124, %v2126
        %v2130 = vsel %vm307, %v2126, %v2128
        %v2134 = vadd.f32 %v2113, %v2129
        %v2135 = vadd.f32 %v2114, %v2130
        %v2136 = vadd.f32 %v2115, %v2128
        %s2137 = sld [smem:[#allocation6 + $0x14]]
        %s2138 = sld [smem:[#allocation6 + $0x45]]
        %v2139 = vstv %s2137
        %v2140 = vmul.f32 %v2139, %v264
        %v2141 = vmul.f32 %v2139, %v260
        %v2142 = vmul.f32 %v2139, %v265
        %2146 = vrot.lane.b32.xlu0 %v2140, 96
        %v2147 = vpop.permute.xlu0 %2146
        %2148 = vrot.lane.b32.xlu0 %v2141, 96
        %v2149 = vpop.permute.xlu0 %2148
        %2150 = vrot.lane.b32.xlu0 %v2142, 96
        %v2151 = vpop.permute.xlu0 %2150
        %v2152 = vsel %vm348, %v2147, %v2149
        %v2153 = vsel %vm348, %v2149, %v2151
        %v2157 = vadd.f32 %v2134, %v2152
        %v2158 = vadd.f32 %v2135, %v2153
        %v2159 = vadd.f32 %v2136, %v2151
        %v2160 = vstv %s2138
        %v2161 = vmul.f32 %v2160, %v276
        %v2162 = vmul.f32 %v2160, %v272
        %v2163 = vmul.f32 %v2160, %v277
        %2167 = vrot.lane.b32.xlu0 %v2161, 96
        %v2168 = vpop.permute.xlu0 %2167
        %2169 = vrot.lane.b32.xlu0 %v2162, 96
        %v2170 = vpop.permute.xlu0 %2169
        %2171 = vrot.lane.b32.xlu0 %v2163, 96
        %v2172 = vpop.permute.xlu0 %2171
        %v2173 = vsel %vm348, %v2168, %v2170
        %v2174 = vsel %vm348, %v2170, %v2172
        %v2178 = vadd.f32 %v2157, %v2173
        %v2179 = vadd.f32 %v2158, %v2174
        %v2180 = vadd.f32 %v2159, %v2172
        %s2181 = sld [smem:[#allocation6 + $0x1b]]
        %s2182 = sld [smem:[#allocation6 + $0x4c]]
        %v2183 = vstv %s2181
        %v2184 = vmul.f32 %v2183, %v264
        %v2185 = vmul.f32 %v2183, %v260
        %v2186 = vmul.f32 %v2183, %v265
        %2190 = vrot.lane.b32.xlu0 %v2184, 80
        %v2191 = vpop.permute.xlu0 %2190
        %2192 = vrot.lane.b32.xlu0 %v2185, 80
        %v2193 = vpop.permute.xlu0 %2192
        %2194 = vrot.lane.b32.xlu0 %v2186, 80
        %v2195 = vpop.permute.xlu0 %2194
        %v2196 = vsel %vm389, %v2191, %v2193
        %v2197 = vsel %vm389, %v2193, %v2195
        %v2201 = vadd.f32 %v2178, %v2196
        %v2202 = vadd.f32 %v2179, %v2197
        %v2203 = vadd.f32 %v2180, %v2195
        %v2204 = vstv %s2182
        %v2205 = vmul.f32 %v2204, %v276
        %v2206 = vmul.f32 %v2204, %v272
        %v2207 = vmul.f32 %v2204, %v277
        %2211 = vrot.lane.b32.xlu0 %v2205, 80
        %v2212 = vpop.permute.xlu0 %2211
        %2213 = vrot.lane.b32.xlu0 %v2206, 80
        %v2214 = vpop.permute.xlu0 %2213
        %2215 = vrot.lane.b32.xlu0 %v2207, 80
        %v2216 = vpop.permute.xlu0 %2215
        %v2217 = vsel %vm389, %v2212, %v2214
        %v2218 = vsel %vm389, %v2214, %v2216
        %v2222 = vadd.f32 %v2201, %v2217
        %v2223 = vadd.f32 %v2202, %v2218
        %v2224 = vadd.f32 %v2203, %v2216
        %s2225 = sld [smem:[#allocation6 + $0x22]]
        %s2226 = sld [smem:[#allocation6 + $0x53]]
        %v2227 = vstv %s2225
        %v2228 = vmul.f32 %v2227, %v264
        %v2229 = vmul.f32 %v2227, %v260
        %v2230 = vmul.f32 %v2227, %v265
        %2234 = vrot.lane.b32.xlu0 %v2228, 64
        %v2235 = vpop.permute.xlu0 %2234
        %2236 = vrot.lane.b32.xlu0 %v2229, 64
        %v2237 = vpop.permute.xlu0 %2236
        %2238 = vrot.lane.b32.xlu0 %v2230, 64
        %v2239 = vpop.permute.xlu0 %2238
        %v2240 = vsel %vm430, %v2235, %v2237
        %v2241 = vsel %vm430, %v2237, %v2239
        %v2245 = vadd.f32 %v2222, %v2240
        %v2246 = vadd.f32 %v2223, %v2241
        %v2247 = vadd.f32 %v2224, %v2239
        %v2248 = vstv %s2226
        %v2249 = vmul.f32 %v2248, %v276
        %v2250 = vmul.f32 %v2248, %v272
        %v2251 = vmul.f32 %v2248, %v277
        %2255 = vrot.lane.b32.xlu0 %v2249, 64
        %v2256 = vpop.permute.xlu0 %2255
        %2257 = vrot.lane.b32.xlu0 %v2250, 64
        %v2258 = vpop.permute.xlu0 %2257
        %2259 = vrot.lane.b32.xlu0 %v2251, 64
        %v2260 = vpop.permute.xlu0 %2259
        %v2261 = vsel %vm430, %v2256, %v2258
        %v2262 = vsel %vm430, %v2258, %v2260
        %v2266 = vadd.f32 %v2245, %v2261
        %v2267 = vadd.f32 %v2246, %v2262
        %v2268 = vadd.f32 %v2247, %v2260
        %s2269 = sld [smem:[#allocation6 + $0x29]]
        %s2270 = sld [smem:[#allocation6 + $0x5a]]
        %v2271 = vstv %s2269
        %v2272 = vmul.f32 %v2271, %v264
        %v2273 = vmul.f32 %v2271, %v260
        %v2274 = vmul.f32 %v2271, %v265
        %2278 = vrot.lane.b32.xlu0 %v2272, 48
        %v2279 = vpop.permute.xlu0 %2278
        %2280 = vrot.lane.b32.xlu0 %v2273, 48
        %v2281 = vpop.permute.xlu0 %2280
        %2282 = vrot.lane.b32.xlu0 %v2274, 48
        %v2283 = vpop.permute.xlu0 %2282
        %v2284 = vsel %vm471, %v2279, %v2281
        %v2285 = vsel %vm471, %v2281, %v2283
        %v2289 = vadd.f32 %v2266, %v2284
        %v2290 = vadd.f32 %v2267, %v2285
        %v2291 = vadd.f32 %v2268, %v2283
        %v2292 = vstv %s2270
        %v2293 = vmul.f32 %v2292, %v276
        %v2294 = vmul.f32 %v2292, %v272
        %v2295 = vmul.f32 %v2292, %v277
        %2299 = vrot.lane.b32.xlu0 %v2293, 48
        %v2300 = vpop.permute.xlu0 %2299
        %2301 = vrot.lane.b32.xlu0 %v2294, 48
        %v2302 = vpop.permute.xlu0 %2301
        %2303 = vrot.lane.b32.xlu0 %v2295, 48
        %v2304 = vpop.permute.xlu0 %2303
        %v2305 = vsel %vm471, %v2300, %v2302
        %v2306 = vsel %vm471, %v2302, %v2304
        %v2310 = vadd.f32 %v2289, %v2305
        %v2311 = vadd.f32 %v2290, %v2306
        %v2312 = vadd.f32 %v2291, %v2304
        %s2313 = sld [smem:[#allocation6 + $0x30]]
        %s2314 = sld [smem:[#allocation6 + $0x61]]
        %v2315 = vstv %s2313
        %v2316 = vmul.f32 %v2315, %v264
        %v2317 = vmul.f32 %v2315, %v260
        %v2318 = vmul.f32 %v2315, %v265
        %2322 = vrot.lane.b32.xlu0 %v2316, 32
        %v2323 = vpop.permute.xlu0 %2322
        %2324 = vrot.lane.b32.xlu0 %v2317, 32
        %v2325 = vpop.permute.xlu0 %2324
        %2326 = vrot.lane.b32.xlu0 %v2318, 32
        %v2327 = vpop.permute.xlu0 %2326
        %v2328 = vsel %vm512, %v2323, %v2325
        %v2329 = vsel %vm512, %v2325, %v2327
        %v2333 = vadd.f32 %v2310, %v2328
        %v2334 = vadd.f32 %v2311, %v2329
        %v2335 = vadd.f32 %v2312, %v2327
        %v2336 = vstv %s2314
        %v2337 = vmul.f32 %v2336, %v276
        %v2338 = vmul.f32 %v2336, %v272
        %v2339 = vmul.f32 %v2336, %v277
        %2343 = vrot.lane.b32.xlu0 %v2337, 32
        %v2344 = vpop.permute.xlu0 %2343
        %2345 = vrot.lane.b32.xlu0 %v2338, 32
        %v2346 = vpop.permute.xlu0 %2345
        %2347 = vrot.lane.b32.xlu0 %v2339, 32
        %v2348 = vpop.permute.xlu0 %2347
        %v2349 = vsel %vm512, %v2344, %v2346
        %v2350 = vsel %vm512, %v2346, %v2348
        %v2354 = vadd.f32 %v2333, %v2349
        %v2355 = vadd.f32 %v2334, %v2350
        %v2356 = vadd.f32 %v2335, %v2348
        %v2360 = vrot.slane %v2354, 2
        %v2361 = vrot.slane %v2355, 2
        %v2362 = vrot.slane %v2356, 2
        %2363 = vrot.lane.b32.xlu0 %v2360, 122
        %v2364 = vpop.permute.xlu0 %2363
        %2365 = vrot.lane.b32.xlu0 %v2361, 122
        %v2366 = vpop.permute.xlu0 %2365
        %2367 = vrot.lane.b32.xlu0 %v2362, 122
        %v2368 = vpop.permute.xlu0 %2367
        %vm2369 = vcmask 998400
        %v2370 = vsel %vm2369, %v2364, %v2366
        %v2371 = vsel %vm2369, %v2366, %v2368
        %v2374 = vmul.f32 %v278, %v2370
        %v2375 = vmul.f32 %v279, %v2371
        %v2378 = vrot.slane %v2374, 6
        %v2379 = vrot.slane %v2375, 6
        %v2382 = vadd.f32 %v2075, %v2378
        %v2383 = vadd.f32 %v2076, %v2379
        %v2384 = vsub.f32 0.0, %v2382
        %v2385 = vsub.f32 0.0, %v2383
        %v2386 = vmul.f32 %v2384, 1.442695
        %v2387 = vpow.pop %v2386
        %v2388 = vmul.f32 %v2385, 1.442695
        %v2389 = vpow.pop %v2388
        %v2390 = vadd.f32 %v2387, 1.0
        %v2391 = vadd.f32 %v2389, 1.0
        %v2392 = vrcp.pop %v2390
        %v2393 = vmul.f32 %v2390, %v2392
        %v2394 = vsub.f32 1.0, %v2393
        %v2395 = vmul.f32 %v2392, %v2394
        %v2396 = vadd.f32 %v2392, %v2395
        %vm2397 = vweird.f32 %v2390
        %vm2398 = vweird.f32 %v2392
        %vm2399 = vmor %vm2397, %vm2398
        %v2400 = vsel %vm2399, %v2392, %v2396
        %v2401 = vand.u32 2147483647, %v2390
        %vm2402 = vcmp.eq.f32.partialorder %v2401, 8.507059e+37
        %v2403 = vand.u32 %v2390, 2147483648
        %v2404 = vor.u32 1.1754944e-38, %v2403
        %v2405 = vsel %vm2402, %v2404, %v2400
        %v2406 = vmul.f32 1.0, %v2405
        %v2407 = vrcp.pop %v2391
        %v2408 = vmul.f32 %v2391, %v2407
        %v2409 = vsub.f32 1.0, %v2408
        %v2410 = vmul.f32 %v2407, %v2409
        %v2411 = vadd.f32 %v2407, %v2410
        %vm2412 = vweird.f32 %v2391
        %vm2413 = vweird.f32 %v2407
        %vm2414 = vmor %vm2412, %vm2413
        %v2415 = vsel %vm2414, %v2407, %v2411
        %v2416 = vand.u32 2147483647, %v2391
        %vm2417 = vcmp.eq.f32.partialorder %v2416, 8.507059e+37
        %v2418 = vand.u32 %v2391, 2147483648
        %v2419 = vor.u32 1.1754944e-38, %v2418
        %v2420 = vsel %vm2417, %v2419, %v2415
        %v2421 = vmul.f32 1.0, %v2420
        %v2422 = vadd.f32 %v2406, 1.0
        %v2423 = vadd.f32 %v2421, 1.0
        %v2424 = vperm.slane %v2422, 0
        %v2425 = vperm.slane %v2423, 0
        %v2426 = vmul.f32 %v218, %v2424
        %v2427 = vmul.f32 %v219, %v2425
        %2428 = vst [vmem:[%s217] sm:$0xff] %v2426
        %2429 = vst [vmem:[%s217 + $0x8] sm:$0xff] %v2427
        %s2430 = sand.u32 %s98, 1
        %s2431 = scalar_lea.sflag [#allocation4], %s2430
        %s2432 = sand.u32 %s98, 1
        %s2433 = smul.addr %s2432, 16
        %s2434 = scalar_lea.vmem [#allocation9], %s2433
        // Predicated region
        $region45: #{tpu_custom_call.1} parent=31 // pred_check
          %p2435 = pneg %p108
        $region46: #{tpu_custom_call.1} parent=31 // pred_check_branch
          %2437 = sbr.rel (%p2435) target = $region48
        $region47: #{tpu_custom_call.1} parent=31 // pred_region
          %2439 = vsyncadd %s2431, 0
          %s2440 = smul.addr %s22, 2
          %s2441 = smul.addr %s2440, 8
          %s2442 = scalar_lea.hbm %s3, %s2441
          %s2444 = sshll.u32 %s2434, 4
          %s2445 = int_to_ptr.vmem [resolvable:$true] %s2444
          %s2446 = sshll.u32 %s2442, 4
          %s2447 = int_to_ptr.hbm [resolvable:$true] %s2446
          %2449 = dma.vmem_to_hbm [thread:$0]  %s2445, 256, %s2447, %s2431
        $region48: #{tpu_custom_call.1} parent=31 // pred_fallthru
          _
      $region32: #{tpu_custom_call.1} parent=5 // pred_fallthru
        _
      %p2450 = scmp.le.s32.totalorder 2, %s17
      // Predicated region
      $region49: #{tpu_custom_call.1} parent=5 // pred_check
        %p2451 = pneg %p2450
      $region50: #{tpu_custom_call.1} parent=5 // pred_check_branch
        %2453 = sbr.rel (%p2451) target = $region52
      $region51: #{tpu_custom_call.1} parent=5 // pred_region
        %s2454 = ssub.s32 %s17, 2
        // Predicated region
        $region53: #{tpu_custom_call.1} parent=51 // pred_check
          %p2455 = pneg %p114
        $region54: #{tpu_custom_call.1} parent=51 // pred_check_branch
          %2457 = sbr.rel (%p2455) target = $region56
        $region55: #{tpu_custom_call.1} parent=51 // pred_region
          %s2458 = sand.u32 %s99, 1
          %s2459 = scalar_lea.sflag [#allocation4], %s2458
          %s2460 = sand.u32 %s99, 1
          %s2461 = smul.addr %s2460, 16
          %s2462 = scalar_lea.vmem [#allocation9], %s2461
          %2464 = dma.done %s2459, 256
        $region56: #{tpu_custom_call.1} parent=51 // pred_fallthru
          _
      $region52: #{tpu_custom_call.1} parent=5 // pred_fallthru
        _
    $region6: #{tpu_custom_call.1} parent=1 // loop_footer
      %s21 = sadd.s32 1, %s17
    $region7: #{tpu_custom_call.1} parent=1 // loop_footer_branch
      %16 = sbr.rel target = $region3
    $region8: #{tpu_custom_call.1} parent=1 // loop_exit
      _
    %2465 = vsyncpa [#allocation3], 1
    %s2466 = scalar_lea.sflag [#allocation3], 1
    %2467 = vsyncpa %s2466, 1
    %2468 = vsyncpa [#allocation8], 1
    %2469 = vsyncpa [#allocation4], 1
    %s2470 = scalar_lea.sflag [#allocation4], 1
    %2471 = vsyncpa %s2470, 1
    %2472 = vsyncpa [#allocation5], 1
    %s2473 = scalar_lea.sflag [#allocation5], 1
    %2474 = vsyncpa %s2473, 1

</llo_original>
